<compile_context>
chip_gen: v6e
topology: v6e:2x2x1
jax: 0.10.0
libtpu: 0.0.40
codegen_flags: <defaults>
</compile_context>

<pallas_src>
import math
import numpy as np

import jax
import jax.numpy as jnp
from jax import lax
from jax.experimental import pallas as pl
from jax.experimental.pallas import tpu as pltpu


# ----------------------------------------------------------------------------
# deterministic parameter / table construction (plain numpy / JAX)
# ----------------------------------------------------------------------------
def build_positional_encoding(max_seq_len, d_model):
    """Replicates PositionalEncoder.__init__ exactly (d_model must be even)."""
    pe = np.zeros((max_seq_len, d_model), dtype=np.float32)
    for pos in range(max_seq_len):
        for i in range(0, d_model, 2):
            pe[pos, i] = math.sin(pos / 10000 ** (2 * i / d_model))
            pe[pos, i + 1] = math.cos(pos / 10000 ** (2 * (i + 1) / d_model))
    return jnp.asarray(pe)


def build_pool_matrix(H, W, gh, gw):
    """Binary (H*W, gh*gw): P[hw, g] = 1 iff pixel hw falls in adaptive-pool cell g."""
    kh, kw = H // gh, W // gw
    idx = np.arange(H * W)
    rows, cols = idx // W, idx % W
    cell = (rows // kh) * gw + (cols // kw)
    P = np.zeros((H * W, gh * gw), dtype=np.float32)
    P[idx, cell] = 1.0
    return P


def init_attention_tf_params(key, in_channels, out_channels):
    """Kaiming-normal (fan_out, relu) init, matching reset_parameters()."""
    k1, k2, k3 = jax.random.split(key, 3)
    std_kq = math.sqrt(2.0 / out_channels)   # conv weight (Co, C, 1, 1) -> fan_out = Co
    std_v = math.sqrt(2.0 / in_channels)
    wk = std_kq * jax.random.normal(k1, (out_channels, in_channels), jnp.float32)
    wq = std_kq * jax.random.normal(k2, (out_channels, in_channels), jnp.float32)
    wv = std_v * jax.random.normal(k3, (in_channels, in_channels), jnp.float32)
    return dict(wk=wk, wq=wq, wv=wv)


# ----------------------------------------------------------------------------
# Pallas kernel: both modalities, Bt batch items per grid step
# ----------------------------------------------------------------------------
def _make_aff_kernel(Bt, T, C, HW, G, m_idx):
    TC = T * C

    def kernel(xf_ref, xe_ref, mp_ref, wv_ref, pool_s_ref, pool_t_ref,
               sum_ref, f1_ref, f2_ref):
        pool_s = pool_s_ref[...]          # (HW, G)  avg pool, 1/(kh*kw) folded in
        pool_t = pool_t_ref[...]          # (G, HW)  nearest upsample

        xf = xf_ref[...]                  # (Bt, T*C, HW)
        xe = xe_ref[...]

        # ---- adaptive avg-pool: one lane-dense (K=HW) MXU matmul per modality,
        #      batched over (Bt, T, C) rows -----------------------------------
        xf_pool = jnp.dot(xf.reshape(Bt * TC, HW), pool_s,
                          preferred_element_type=jnp.float32).reshape(Bt, T, C, G)
        xe_pool = jnp.dot(xe.reshape(Bt * TC, HW), pool_s,
                          preferred_element_type=jnp.float32).reshape(Bt, T, C, G)

        x4f = xf.reshape(Bt, T, C, HW)
        x4e = xe.reshape(Bt, T, C, HW)

        # queries (pooled + full-res residual) come for free from the OTHER modality
        q_pool_1 = xe_pool[:, m_idx]      # (Bt, C, G)  aff1 query = enhancementF[:, m]
        q_pool_2 = xf_pool[:, m_idx]      # (Bt, C, G)  aff2 query = functionalF[:, m]
        q_img_1 = x4e[:, m_idx]           # (Bt, C, HW) residual for aff1
        q_img_2 = x4f[:, m_idx]           # (Bt, C, HW) residual for aff2

        def one_modality(x4, x_pool, q_pool, q_img, mp, wv):
            # mp = [ M*sqrt(C)/sqrt(dk) ; (pe[:T]@M)/sqrt(dk) ], M = wk^T wq : (C+T, C)
            mp_b = jnp.broadcast_to(mp, (Bt,) + mp.shape)
            ab = lax.dot_general(
                mp_b, q_pool.astype(mp.dtype),
                dimension_numbers=(((2,), (1,)), ((0,), (0,))),
                preferred_element_type=jnp.float32)               # (Bt, C+T, G)
            A = ab[:, :C, :]               # (Bt, C, G)
            bias = ab[:, C:, :]            # (Bt, T, G)  positional-encoding term

            # logits[b,t,g] = sum_c x_pool[b,t,c,g] * A[b,c,g] + bias[b,t,g]
            logits = jnp.sum(x_pool * A[:, None, :, :], axis=2) + bias   # (Bt, T, G)

            # softmax over the temporal axis (f32; reciprocal on the EUP slot)
            mx = jnp.max(logits, axis=1, keepdims=True)
            p = jnp.exp(logits - mx)
            denom = jnp.sum(p, axis=1, keepdims=True)
            w = p * pl.reciprocal(denom, approx=True)                    # (Bt, T, G)

            # nearest upsample of the attention map: one MXU push over (Bt*T) rows
            w_up = jnp.dot(w.reshape(Bt * T, G).astype(pool_t.dtype), pool_t,
                           preferred_element_type=jnp.float32)
            w_up = w_up.reshape(Bt, T, 1, HW)

            # weighted temporal sum FIRST (pure VPU), then one (C,C)@(C,HW)
            # value conv (linearity reassociation; no block-diag / factor-T waste)
            y = jnp.sum(x4.astype(jnp.float32) * w_up, axis=1)           # (Bt, C, HW)
            wv_b = jnp.broadcast_to(wv, (Bt,) + wv.shape)
            out = lax.dot_general(
                wv_b, y.astype(wv.dtype),
                dimension_numbers=(((2,), (1,)), ((0,), (0,))),
                preferred_element_type=jnp.float32)                      # (Bt, C, HW)
            return q_img.astype(jnp.float32) + out

        f1 = one_modality(x4f, xf_pool, q_pool_1, q_img_1, mp_ref[0], wv_ref[0])
        f2 = one_modality(x4e, xe_pool, q_pool_2, q_img_2, mp_ref[1], wv_ref[1])

        f1_ref[...] = f1.astype(f1_ref.dtype)
        f2_ref[...] = f2.astype(f2_ref.dtype)
        sum_ref[...] = (f1 + f2).astype(sum_ref.dtype)

    return kernel


def aff_forward_pallas(functionalF, enhancementF, m_indices, params1, params2, pe,
                       grid_hw, *, batch_tile=None, use_bf16=False):
    """AFF.forward: co-attention modality fusion, fully fused in one pallas_call."""
    B, T, C, H, W = functionalF.shape
    assert enhancementF.shape == functionalF.shape
    Co = params1["wk"].shape[0]
    gh, gw = grid_hw
    assert H % gh == 0 and W % gw == 0, "kernel assumes a divisible adaptive-pool grid"
    HW, G = H * W, gh * gw
    TC = T * C
    m_idx = int(m_indices[0])

    # batch tile: keep the grid an even, parallel axis when possible (v7x: 2 TCs)
    if batch_tile is None:
        batch_tile = B // 2 if (B % 2 == 0 and B >= 2) else B
    assert B % batch_tile == 0, "batch_tile must divide B"
    n_steps = B // batch_tile

    out_dtype = functionalF.dtype
    compute_dtype = jnp.bfloat16 if use_bf16 else jnp.float32

    # flatten (T,C) and (H,W): contiguous reshape; no HBM stack/concat of modalities
    xf = functionalF.reshape(B, TC, HW)
    xe = enhancementF.reshape(B, TC, HW)
    if xf.dtype != compute_dtype:
        xf = xf.astype(compute_dtype)
        xe = xe.astype(compute_dtype)

    scale = math.sqrt(C)                        # posenc multiplies by sqrt(d_model)
    inv_area = 1.0 / ((H // gh) * (W // gw))    # adaptive-avg-pool averaging factor
    inv_sqrt_dk = 1.0 / math.sqrt(Co)

    pool = build_pool_matrix(H, W, gh, gw)                        # (HW, G) membership
    pool_s = jnp.asarray(pool * inv_area).astype(compute_dtype)   # averaging folded in
    pool_t = jnp.asarray(pool.T).astype(compute_dtype)            # nearest upsample

    pe_T = pe[:T].astype(jnp.float32)                             # (T, C)

    def modality_mp(p):
        M = p["wk"].T @ p["wq"]                                   # (C, C) = wk^T wq
        top = M * (scale * inv_sqrt_dk)                           # sqrt(C)/sqrt(dk) folded
        bot = (pe_T @ M) * inv_sqrt_dk                            # posenc bias term
        return jnp.concatenate([top, bot], axis=0)                # (C + T, C)

    MP = jnp.stack([modality_mp(params1), modality_mp(params2)], 0).astype(compute_dtype)
    WV = jnp.stack([params1["wv"], params2["wv"]], 0).astype(compute_dtype)

    # explicit VMEM budget (double-buffered blocks + constants + working set),
    # floored at 32 MiB (lifts v5e's 16 MiB default), capped at 64 MiB (v7x physical)
    itemsize = jnp.dtype(compute_dtype).itemsize
    out_itemsize = jnp.dtype(out_dtype).itemsize
    x_block = batch_tile * TC * HW * itemsize
    out_block = batch_tile * C * HW * out_itemsize
    const_bytes = (2 * (C + T) * C + 2 * C * C + 2 * HW * G) * itemsize
    vmem_needed = 2 * (2 * x_block + 3 * out_block) + 2 * const_bytes + 12 * x_block
    vmem_limit = int(min(64 * 2 ** 20, max(32 * 2 ** 20, vmem_needed)))

    kernel = _make_aff_kernel(batch_tile, T, C, HW, G, m_idx)

    out_sum, f1, f2 = pl.pallas_call(
        kernel,
        out_shape=(
            jax.ShapeDtypeStruct((B, C, HW), out_dtype),
            jax.ShapeDtypeStruct((B, C, HW), out_dtype),
            jax.ShapeDtypeStruct((B, C, HW), out_dtype),
        ),
        grid_spec=pltpu.PrefetchScalarGridSpec(
            num_scalar_prefetch=0,
            grid=(n_steps,),
            in_specs=[
                pl.BlockSpec((batch_tile, TC, HW), lambda i: (i, 0, 0)),  # functionalF
                pl.BlockSpec((batch_tile, TC, HW), lambda i: (i, 0, 0)),  # enhancementF
                pl.BlockSpec((2, C + T, C),        lambda i: (0, 0, 0)),  # per-modality MP
                pl.BlockSpec((2, C, C),            lambda i: (0, 0, 0)),  # per-modality wv
                pl.BlockSpec((HW, G),              lambda i: (0, 0)),     # avg-pool matrix
                pl.BlockSpec((G, HW),              lambda i: (0, 0)),     # upsample matrix
            ],
            out_specs=(
                pl.BlockSpec((batch_tile, C, HW), lambda i: (i, 0, 0)),   # f1 + f2
                pl.BlockSpec((batch_tile, C, HW), lambda i: (i, 0, 0)),   # f1
                pl.BlockSpec((batch_tile, C, HW), lambda i: (i, 0, 0)),   # f2
            ),
        ),
        compiler_params=pltpu.CompilerParams(
            dimension_semantics=("parallel",),
            vmem_limit_bytes=vmem_limit,
        ),
    )(xf, xe, MP, WV, pool_s, pool_t)

    return (out_sum.reshape(B, C, H, W),
            f1.reshape(B, C, H, W),
            f2.reshape(B, C, H, W))


# ----------------------------------------------------------------------------
# pure-JAX reference (mirrors the PyTorch forward) for verification
# ----------------------------------------------------------------------------
def attention_tf_ref(x, query_x, wk, wq, wv, pe, grid_hw):
    B, T, C, H, W = x.shape
    Co = wk.shape[0]
    gh, gw = grid_hw
    kh, kw = H // gh, W // gw
    v = jnp.einsum("oc,btchw->btohw", wv, x)                                   # value_conv
    xp = x.reshape(B, T, C, gh, kh, gw, kw).mean(axis=(4, 6))                  # adaptive avg pool
    xp = xp * math.sqrt(C) + pe[None, :T, :, None, None]                       # posenc
    k = jnp.einsum("oc,btcij->btoij", wk, xp)                                  # key_conv
    qp = query_x.reshape(B, C, gh, kh, gw, kw).mean(axis=(3, 5))               # avg pool of query
    qf = jnp.einsum("oc,bcij->boij", wq, qp)                                   # query_conv
    scores = jnp.sum(qf[:, None] * k, axis=2) / math.sqrt(Co)
    scores = jax.nn.softmax(scores, axis=1)
    scores_up = jnp.repeat(jnp.repeat(scores, kh, axis=2), kw, axis=3)         # nearest upsample
    out = jnp.sum(scores_up[:, :, None] * v, axis=1)
    return out + query_x


def aff_forward_ref(functionalF, enhancementF, m_indices, params1, params2, pe, grid_hw):
    q1 = enhancementF[:, m_indices[0]]
    q2 = functionalF[:, m_indices[0]]
    f1 = attention_tf_ref(functionalF, q1,
                          params1["wk"], params1["wq"], params1["wv"], pe, grid_hw)
    f2 = attention_tf_ref(enhancementF, q2,
                          params2["wk"], params2["wq"], params2["wv"], pe, grid_hw)
    return f1 + f2, f1, f2


# ----------------------------------------------------------------------------
if __name__ == "__main__":
    # small shapes consistent with AFF's [B, T, C, H, W] convention
    B, T, C, H, W = 2, 4, 4, 16, 16
    Co = 8                      # out_channels
    grid_hw = (4, 4)            # AdaptiveAvgPool2d grid; original_scale == (H, W)

    key = jax.random.PRNGKey(0)
    kx, ke, kp1, kp2 = jax.random.split(key, 4)
    functionalF = jax.random.normal(kx, (B, T, C, H, W), jnp.float32)
    enhancementF = jax.random.normal(ke, (B, T, C, H, W), jnp.float32)
    m_indices = [0]

    params1 = init_attention_tf_params(kp1, C, Co)
    params2 = init_attention_tf_params(kp2, C, Co)
    pe = build_positional_encoding(max_seq_len=16, d_model=C)

    out_sum, out_f1, out_f2 = aff_forward_pallas(
        functionalF, enhancementF, m_indices, params1, params2, pe, grid_hw)
    jax.block_until_ready((out_sum, out_f1, out_f2))

    ref_sum, ref_f1, ref_f2 = aff_forward_ref(
        functionalF, enhancementF, m_indices, params1, params2, pe, grid_hw)
    jax.block_until_ready((ref_sum, ref_f1, ref_f2))

    for got, ref in ((out_sum, ref_sum), (out_f1, ref_f1), (out_f2, ref_f2)):
        err = float(jnp.max(jnp.abs(got - ref)))
        assert err < 5e-2, f"mismatch vs reference: max abs err = {err}"

    print("KERNEL_OK")
</pallas_src>

<mosaic_0001>
module attributes {stable_mosaic.version = 11 : i64} {
  func.func @kernel(%arg0: i32, %arg1: memref<1x16x256xf32, #tpu.memory_space<vmem>>, %arg2: memref<1x16x256xf32, #tpu.memory_space<vmem>>, %arg3: memref<2x8x4xf32, #tpu.memory_space<vmem>>, %arg4: memref<2x4x4xf32, #tpu.memory_space<vmem>>, %arg5: memref<256x16xf32, #tpu.memory_space<vmem>>, %arg6: memref<16x256xf32, #tpu.memory_space<vmem>>, %arg7: memref<1x4x256xf32, #tpu.memory_space<vmem>>, %arg8: memref<1x4x256xf32, #tpu.memory_space<vmem>>, %arg9: memref<1x4x256xf32, #tpu.memory_space<vmem>>) attributes {dimension_semantics = [#tpu.dimension_semantics<parallel>], iteration_bounds = array<i64: 2>, scalar_prefetch = 0 : i64, scratch_operands = 0 : i64, tpu.core_type = #tpu.core_type<tc>, window_params = [{transform_indices = @transform_0, window_bounds = array<i64: 1, 16, 256>}, {transform_indices = @transform_1, window_bounds = array<i64: 1, 16, 256>}, {pipeline_mode = #tpu.pipeline_mode<synchronous>, transform_indices = @transform_2, window_bounds = array<i64: 2, 8, 4>}, {pipeline_mode = #tpu.pipeline_mode<synchronous>, transform_indices = @transform_3, window_bounds = array<i64: 2, 4, 4>}, {pipeline_mode = #tpu.pipeline_mode<synchronous>, transform_indices = @transform_4, window_bounds = array<i64: 256, 16>}, {pipeline_mode = #tpu.pipeline_mode<synchronous>, transform_indices = @transform_5, window_bounds = array<i64: 16, 256>}, {transform_indices = @transform_6, window_bounds = array<i64: 1, 4, 256>}, {transform_indices = @transform_7, window_bounds = array<i64: 1, 4, 256>}, {transform_indices = @transform_8, window_bounds = array<i64: 1, 4, 256>}]} {
    %c0 = arith.constant 0 : index
    %c0_0 = arith.constant 0 : index
    %0 = vector.load %arg5[%c0, %c0_0] : memref<256x16xf32, #tpu.memory_space<vmem>>, vector<256x16xf32>
    %c0_1 = arith.constant 0 : index
    %c0_2 = arith.constant 0 : index
    %1 = vector.load %arg6[%c0_1, %c0_2] : memref<16x256xf32, #tpu.memory_space<vmem>>, vector<16x256xf32>
    %c0_3 = arith.constant 0 : index
    %c0_4 = arith.constant 0 : index
    %c0_5 = arith.constant 0 : index
    %2 = vector.load %arg1[%c0_3, %c0_4, %c0_5] : memref<1x16x256xf32, #tpu.memory_space<vmem>>, vector<1x16x256xf32>
    %c0_6 = arith.constant 0 : index
    %c0_7 = arith.constant 0 : index
    %c0_8 = arith.constant 0 : index
    %3 = vector.load %arg2[%c0_6, %c0_7, %c0_8] : memref<1x16x256xf32, #tpu.memory_space<vmem>>, vector<1x16x256xf32>
    %4 = vector.shape_cast %2 : vector<1x16x256xf32> to vector<16x256xf32>
    %cst = arith.constant dense<0.000000e+00> : vector<16x16xf32>
    %5 = tpu.matmul %4, %0, %cst {dimension_numbers = #tpu.dot_dimension_numbers<[1], [0], [0], [1], [0, 0, 1, 1], [], []>} : vector<16x256xf32>, vector<256x16xf32>, vector<16x16xf32> -> vector<16x16xf32>
    %6 = vector.shape_cast %5 : vector<16x16xf32> to vector<1x4x4x16xf32>
    %7 = vector.shape_cast %3 : vector<1x16x256xf32> to vector<16x256xf32>
    %cst_9 = arith.constant dense<0.000000e+00> : vector<16x16xf32>
    %8 = tpu.matmul %7, %0, %cst_9 {dimension_numbers = #tpu.dot_dimension_numbers<[1], [0], [0], [1], [0, 0, 1, 1], [], []>} : vector<16x256xf32>, vector<256x16xf32>, vector<16x16xf32> -> vector<16x16xf32>
    %9 = vector.shape_cast %8 : vector<16x16xf32> to vector<1x4x4x16xf32>
    %10 = vector.shape_cast %2 : vector<1x16x256xf32> to vector<1x4x4x256xf32>
    %11 = vector.shape_cast %3 : vector<1x16x256xf32> to vector<1x4x4x256xf32>
    %12 = vector.extract_strided_slice %9 {offsets = [0, 0, 0, 0], sizes = [1, 1, 4, 16], strides = [1, 1, 1, 1]} : vector<1x4x4x16xf32> to vector<1x1x4x16xf32>
    %13 = vector.shape_cast %12 : vector<1x1x4x16xf32> to vector<1x4x16xf32>
    %14 = vector.extract_strided_slice %6 {offsets = [0, 0, 0, 0], sizes = [1, 1, 4, 16], strides = [1, 1, 1, 1]} : vector<1x4x4x16xf32> to vector<1x1x4x16xf32>
    %15 = vector.shape_cast %14 : vector<1x1x4x16xf32> to vector<1x4x16xf32>
    %16 = vector.extract_strided_slice %11 {offsets = [0, 0, 0, 0], sizes = [1, 1, 4, 256], strides = [1, 1, 1, 1]} : vector<1x4x4x256xf32> to vector<1x1x4x256xf32>
    %17 = vector.shape_cast %16 : vector<1x1x4x256xf32> to vector<1x4x256xf32>
    %18 = vector.extract_strided_slice %10 {offsets = [0, 0, 0, 0], sizes = [1, 1, 4, 256], strides = [1, 1, 1, 1]} : vector<1x4x4x256xf32> to vector<1x1x4x256xf32>
    %19 = vector.shape_cast %18 : vector<1x1x4x256xf32> to vector<1x4x256xf32>
    %c0_10 = arith.constant 0 : index
    %c0_11 = arith.constant 0 : index
    %c0_12 = arith.constant 0 : index
    %20 = vector.load %arg3[%c0_10, %c0_11, %c0_12] : memref<2x8x4xf32, #tpu.memory_space<vmem>>, vector<1x8x4xf32>
    %21 = vector.shape_cast %20 : vector<1x8x4xf32> to vector<8x4xf32>
    %c0_13 = arith.constant 0 : index
    %c0_14 = arith.constant 0 : index
    %c0_15 = arith.constant 0 : index
    %22 = vector.load %arg4[%c0_13, %c0_14, %c0_15] : memref<2x4x4xf32, #tpu.memory_space<vmem>>, vector<1x4x4xf32>
    %23 = vector.shape_cast %22 : vector<1x4x4xf32> to vector<4x4xf32>
    %24 = vector.shape_cast %21 : vector<8x4xf32> to vector<1x8x4xf32>
    %cst_16 = arith.constant dense<0.000000e+00> : vector<1x8x16xf32>
    %25 = tpu.matmul %24, %13, %cst_16 {dimension_numbers = #tpu.dot_dimension_numbers<[2], [1], [1], [2], [0, 0, 0, 1, 1, 2], [0], [0]>} : vector<1x8x4xf32>, vector<1x4x16xf32>, vector<1x8x16xf32> -> vector<1x8x16xf32>
    %26 = vector.extract_strided_slice %25 {offsets = [0, 0, 0], sizes = [1, 4, 16], strides = [1, 1, 1]} : vector<1x8x16xf32> to vector<1x4x16xf32>
    %27 = vector.extract_strided_slice %25 {offsets = [0, 4, 0], sizes = [1, 4, 16], strides = [1, 1, 1]} : vector<1x8x16xf32> to vector<1x4x16xf32>
    %28 = vector.shape_cast %26 : vector<1x4x16xf32> to vector<1x1x4x16xf32>
    %29 = vector.broadcast %28 : vector<1x1x4x16xf32> to vector<1x4x4x16xf32>
    %30 = arith.mulf %6, %29 : vector<1x4x4x16xf32>
    %cst_17 = arith.constant dense<0.000000e+00> : vector<1x4x16xf32>
    %31 = vector.multi_reduction <add>, %30, %cst_17 [2] : vector<1x4x4x16xf32> to vector<1x4x16xf32>
    %32 = arith.addf %31, %27 : vector<1x4x16xf32>
    %cst_18 = arith.constant dense<0xFF800000> : vector<1x16xf32>
    %33 = vector.multi_reduction <maximumf>, %32, %cst_18 [1] : vector<1x4x16xf32> to vector<1x16xf32>
    %34 = vector.shape_cast %33 : vector<1x16xf32> to vector<1x1x16xf32>
    %35 = vector.broadcast %34 : vector<1x1x16xf32> to vector<1x4x16xf32>
    %36 = arith.subf %32, %35 : vector<1x4x16xf32>
    %37 = math.exp %36 : vector<1x4x16xf32>
    %cst_19 = arith.constant dense<0.000000e+00> : vector<1x16xf32>
    %38 = vector.multi_reduction <add>, %37, %cst_19 [1] : vector<1x4x16xf32> to vector<1x16xf32>
    %39 = vector.shape_cast %38 : vector<1x16xf32> to vector<1x1x16xf32>
    %40 = tpu.reciprocal %39 {approx = true} : vector<1x1x16xf32> -> vector<1x1x16xf32>
    %41 = vector.broadcast %40 : vector<1x1x16xf32> to vector<1x4x16xf32>
    %42 = arith.mulf %37, %41 : vector<1x4x16xf32>
    %43 = vector.shape_cast %42 : vector<1x4x16xf32> to vector<4x16xf32>
    %cst_20 = arith.constant dense<0.000000e+00> : vector<4x256xf32>
    %44 = tpu.matmul %43, %1, %cst_20 {dimension_numbers = #tpu.dot_dimension_numbers<[1], [0], [0], [1], [0, 0, 1, 1], [], []>} : vector<4x16xf32>, vector<16x256xf32>, vector<4x256xf32> -> vector<4x256xf32>
    %45 = vector.shape_cast %44 : vector<4x256xf32> to vector<1x4x1x256xf32>
    %46 = vector.broadcast %45 : vector<1x4x1x256xf32> to vector<1x4x4x256xf32>
    %47 = arith.mulf %10, %46 : vector<1x4x4x256xf32>
    %cst_21 = arith.constant dense<0.000000e+00> : vector<1x4x256xf32>
    %48 = vector.multi_reduction <add>, %47, %cst_21 [1] : vector<1x4x4x256xf32> to vector<1x4x256xf32>
    %49 = vector.shape_cast %23 : vector<4x4xf32> to vector<1x4x4xf32>
    %cst_22 = arith.constant dense<0.000000e+00> : vector<1x4x256xf32>
    %50 = tpu.matmul %49, %48, %cst_22 {dimension_numbers = #tpu.dot_dimension_numbers<[2], [1], [1], [2], [0, 0, 0, 1, 1, 2], [0], [0]>} : vector<1x4x4xf32>, vector<1x4x256xf32>, vector<1x4x256xf32> -> vector<1x4x256xf32>
    %51 = arith.addf %17, %50 : vector<1x4x256xf32>
    %c1 = arith.constant 1 : index
    %c0_23 = arith.constant 0 : index
    %c0_24 = arith.constant 0 : index
    %52 = vector.load %arg3[%c1, %c0_23, %c0_24] : memref<2x8x4xf32, #tpu.memory_space<vmem>>, vector<1x8x4xf32>
    %53 = vector.shape_cast %52 : vector<1x8x4xf32> to vector<8x4xf32>
    %c1_25 = arith.constant 1 : index
    %c0_26 = arith.constant 0 : index
    %c0_27 = arith.constant 0 : index
    %54 = vector.load %arg4[%c1_25, %c0_26, %c0_27] : memref<2x4x4xf32, #tpu.memory_space<vmem>>, vector<1x4x4xf32>
    %55 = vector.shape_cast %54 : vector<1x4x4xf32> to vector<4x4xf32>
    %56 = vector.shape_cast %53 : vector<8x4xf32> to vector<1x8x4xf32>
    %cst_28 = arith.constant dense<0.000000e+00> : vector<1x8x16xf32>
    %57 = tpu.matmul %56, %15, %cst_28 {dimension_numbers = #tpu.dot_dimension_numbers<[2], [1], [1], [2], [0, 0, 0, 1, 1, 2], [0], [0]>} : vector<1x8x4xf32>, vector<1x4x16xf32>, vector<1x8x16xf32> -> vector<1x8x16xf32>
    %58 = vector.extract_strided_slice %57 {offsets = [0, 0, 0], sizes = [1, 4, 16], strides = [1, 1, 1]} : vector<1x8x16xf32> to vector<1x4x16xf32>
    %59 = vector.extract_strided_slice %57 {offsets = [0, 4, 0], sizes = [1, 4, 16], strides = [1, 1, 1]} : vector<1x8x16xf32> to vector<1x4x16xf32>
    %60 = vector.shape_cast %58 : vector<1x4x16xf32> to vector<1x1x4x16xf32>
    %61 = vector.broadcast %60 : vector<1x1x4x16xf32> to vector<1x4x4x16xf32>
    %62 = arith.mulf %9, %61 : vector<1x4x4x16xf32>
    %cst_29 = arith.constant dense<0.000000e+00> : vector<1x4x16xf32>
    %63 = vector.multi_reduction <add>, %62, %cst_29 [2] : vector<1x4x4x16xf32> to vector<1x4x16xf32>
    %64 = arith.addf %63, %59 : vector<1x4x16xf32>
    %cst_30 = arith.constant dense<0xFF800000> : vector<1x16xf32>
    %65 = vector.multi_reduction <maximumf>, %64, %cst_30 [1] : vector<1x4x16xf32> to vector<1x16xf32>
    %66 = vector.shape_cast %65 : vector<1x16xf32> to vector<1x1x16xf32>
    %67 = vector.broadcast %66 : vector<1x1x16xf32> to vector<1x4x16xf32>
    %68 = arith.subf %64, %67 : vector<1x4x16xf32>
    %69 = math.exp %68 : vector<1x4x16xf32>
    %cst_31 = arith.constant dense<0.000000e+00> : vector<1x16xf32>
    %70 = vector.multi_reduction <add>, %69, %cst_31 [1] : vector<1x4x16xf32> to vector<1x16xf32>
    %71 = vector.shape_cast %70 : vector<1x16xf32> to vector<1x1x16xf32>
    %72 = tpu.reciprocal %71 {approx = true} : vector<1x1x16xf32> -> vector<1x1x16xf32>
    %73 = vector.broadcast %72 : vector<1x1x16xf32> to vector<1x4x16xf32>
    %74 = arith.mulf %69, %73 : vector<1x4x16xf32>
    %75 = vector.shape_cast %74 : vector<1x4x16xf32> to vector<4x16xf32>
    %cst_32 = arith.constant dense<0.000000e+00> : vector<4x256xf32>
    %76 = tpu.matmul %75, %1, %cst_32 {dimension_numbers = #tpu.dot_dimension_numbers<[1], [0], [0], [1], [0, 0, 1, 1], [], []>} : vector<4x16xf32>, vector<16x256xf32>, vector<4x256xf32> -> vector<4x256xf32>
    %77 = vector.shape_cast %76 : vector<4x256xf32> to vector<1x4x1x256xf32>
    %78 = vector.broadcast %77 : vector<1x4x1x256xf32> to vector<1x4x4x256xf32>
    %79 = arith.mulf %11, %78 : vector<1x4x4x256xf32>
    %cst_33 = arith.constant dense<0.000000e+00> : vector<1x4x256xf32>
    %80 = vector.multi_reduction <add>, %79, %cst_33 [1] : vector<1x4x4x256xf32> to vector<1x4x256xf32>
    %81 = vector.shape_cast %55 : vector<4x4xf32> to vector<1x4x4xf32>
    %cst_34 = arith.constant dense<0.000000e+00> : vector<1x4x256xf32>
    %82 = tpu.matmul %81, %80, %cst_34 {dimension_numbers = #tpu.dot_dimension_numbers<[2], [1], [1], [2], [0, 0, 0, 1, 1, 2], [0], [0]>} : vector<1x4x4xf32>, vector<1x4x256xf32>, vector<1x4x256xf32> -> vector<1x4x256xf32>
    %83 = arith.addf %19, %82 : vector<1x4x256xf32>
    %c0_35 = arith.constant 0 : index
    %c0_36 = arith.constant 0 : index
    %c0_37 = arith.constant 0 : index
    %84 = vector.load %arg8[%c0_35, %c0_36, %c0_37] : memref<1x4x256xf32, #tpu.memory_space<vmem>>, vector<1x4x256xf32>
    tpu.vector_store %arg8[%c0_35, %c0_36, %c0_37], %51 {strides = array<i32>} : memref<1x4x256xf32, #tpu.memory_space<vmem>>, vector<1x4x256xf32>,
    %c0_38 = arith.constant 0 : index
    %c0_39 = arith.constant 0 : index
    %c0_40 = arith.constant 0 : index
    %85 = vector.load %arg9[%c0_38, %c0_39, %c0_40] : memref<1x4x256xf32, #tpu.memory_space<vmem>>, vector<1x4x256xf32>
    tpu.vector_store %arg9[%c0_38, %c0_39, %c0_40], %83 {strides = array<i32>} : memref<1x4x256xf32, #tpu.memory_space<vmem>>, vector<1x4x256xf32>,
    %86 = arith.addf %51, %83 : vector<1x4x256xf32>
    %c0_41 = arith.constant 0 : index
    %c0_42 = arith.constant 0 : index
    %c0_43 = arith.constant 0 : index
    %87 = vector.load %arg7[%c0_41, %c0_42, %c0_43] : memref<1x4x256xf32, #tpu.memory_space<vmem>>, vector<1x4x256xf32>
    tpu.vector_store %arg7[%c0_41, %c0_42, %c0_43], %86 {strides = array<i32>} : memref<1x4x256xf32, #tpu.memory_space<vmem>>, vector<1x4x256xf32>,
    return
  }
  func.func @transform_0(%arg0: i32) -> (i32, i32, i32) {
    %c0_i32 = arith.constant 0 : i32
    %c0_i32_0 = arith.constant 0 : i32
    %c0_i32_1 = arith.constant 0 : i32
    return %arg0, %c0_i32, %c0_i32_0 : i32, i32, i32
  }
  func.func @transform_1(%arg0: i32) -> (i32, i32, i32) {
    %c0_i32 = arith.constant 0 : i32
    %c0_i32_0 = arith.constant 0 : i32
    %c0_i32_1 = arith.constant 0 : i32
    return %arg0, %c0_i32, %c0_i32_0 : i32, i32, i32
  }
  func.func @transform_2(%arg0: i32) -> (i32, i32, i32) {
    %c0_i32 = arith.constant 0 : i32
    %c0_i32_0 = arith.constant 0 : i32
    %c0_i32_1 = arith.constant 0 : i32
    %c0_i32_2 = arith.constant 0 : i32
    return %c0_i32, %c0_i32_0, %c0_i32_1 : i32, i32, i32
  }
  func.func @transform_3(%arg0: i32) -> (i32, i32, i32) {
    %c0_i32 = arith.constant 0 : i32
    %c0_i32_0 = arith.constant 0 : i32
    %c0_i32_1 = arith.constant 0 : i32
    %c0_i32_2 = arith.constant 0 : i32
    return %c0_i32, %c0_i32_0, %c0_i32_1 : i32, i32, i32
  }
  func.func @transform_4(%arg0: i32) -> (i32, i32) {
    %c0_i32 = arith.constant 0 : i32
    %c0_i32_0 = arith.constant 0 : i32
    %c0_i32_1 = arith.constant 0 : i32
    return %c0_i32, %c0_i32_0 : i32, i32
  }
  func.func @transform_5(%arg0: i32) -> (i32, i32) {
    %c0_i32 = arith.constant 0 : i32
    %c0_i32_0 = arith.constant 0 : i32
    %c0_i32_1 = arith.constant 0 : i32
    return %c0_i32, %c0_i32_0 : i32, i32
  }
  func.func @transform_6(%arg0: i32) -> (i32, i32, i32) {
    %c0_i32 = arith.constant 0 : i32
    %c0_i32_0 = arith.constant 0 : i32
    %c0_i32_1 = arith.constant 0 : i32
    return %arg0, %c0_i32, %c0_i32_0 : i32, i32, i32
  }
  func.func @transform_7(%arg0: i32) -> (i32, i32, i32) {
    %c0_i32 = arith.constant 0 : i32
    %c0_i32_0 = arith.constant 0 : i32
    %c0_i32_1 = arith.constant 0 : i32
    return %arg0, %c0_i32, %c0_i32_0 : i32, i32, i32
  }
  func.func @transform_8(%arg0: i32) -> (i32, i32, i32) {
    %c0_i32 = arith.constant 0 : i32
    %c0_i32_0 = arith.constant 0 : i32
    %c0_i32_1 = arith.constant 0 : i32
    return %arg0, %c0_i32, %c0_i32_0 : i32, i32, i32
  }
}

</mosaic_0001>

<llo_original>
// kernel: tpu_custom_call.1
$region0: #{tpu_custom_call.1}
  #allocation0 [shape = 'u32[]', space=smem, size = 0x4, offset = 0x4, fixed_abs, tag = 'smem constant byte address 0x4 - core index']
  #allocation1 [shape = 'u32[144,128]{1,0:T(1,128)}', space=vmem, size = 0x12000, scoped, tag = 'internal scratch']
  %s0 = inlined_call_operand.vmem [shape: f32[2,16,256], index: 0, kind: input, shape index: {}]
  %s1 = inlined_call_operand.vmem [shape: f32[2,16,256], index: 1, kind: input, shape index: {}]
  %s2 = inlined_call_operand.vmem [shape: f32[2,8,4], index: 2, kind: input, shape index: {}]
  %s3 = inlined_call_operand.vmem [shape: f32[2,4,4], index: 3, kind: input, shape index: {}]
  %s4 = inlined_call_operand.vmem [shape: f32[256,16], index: 4, kind: input, shape index: {}]
  %s5 = inlined_call_operand.vmem [shape: f32[16,256], index: 5, kind: input, shape index: {}]
  %s6 = inlined_call_operand.hbm [shape: f32[2,4,256], index: 6, kind: output, shape index: {0}]
  %s7 = inlined_call_operand.hbm [shape: f32[2,4,256], index: 7, kind: output, shape index: {1}]
  %s8 = inlined_call_operand.hbm [shape: f32[2,4,256], index: 8, kind: output, shape index: {2}]
  %9 = xla_tuple %s6, %s7, %s8
  %s10 = sld [smem:[#allocation0]]
  $region73: #{tpu_custom_call.1} parent=0
    _
  %s12 = ssub.s32 1, %s10
  %s13 = scalar_select 0, %s12, %s10
  $region1: #{tpu_custom_call.1} parent=0
    #allocation2 [shape = 'u8[8192]{0}', space=vmem, size = 0x2000, scoped, tag = 'output window, operand 0']
    #allocation3 [shape = 's32[2]{0}', space=sflag, size = 0x8, scoped, tag = 'scoped memory for tpu_custom_call.1']
    #allocation4 [shape = 'u8[8192]{0}', space=vmem, size = 0x2000, scoped, tag = 'output window, operand 1']
    #allocation5 [shape = 's32[2]{0}', space=sflag, size = 0x8, scoped, tag = 'scoped memory for tpu_custom_call.1']
    #allocation6 [shape = 'u8[8192]{0}', space=vmem, size = 0x2000, scoped, tag = 'output window, operand 2']
    %14 = vsyncpa [#allocation3], 0
    %s15 = scalar_lea.sflag [#allocation3], 1
    %16 = vsyncpa %s15, 0
    %17 = vsyncpa [#allocation5], 0
    %s18 = scalar_lea.sflag [#allocation5], 1
    %19 = vsyncpa %s18, 0
    loop: start=0, step=1, limit=4
    $region2: #{tpu_custom_call.1} parent=1 // loop_pre_header
      _
    $region3: #{tpu_custom_call.1} parent=1 // loop_header
      %s21 = sphi 0, %s25
      %p22 = scmp.ge.s32.totalorder %s21, 4
      %s31 = sphi 0, %s33
      %s34 = sphi 0, %s31
      %s35 = sphi 0, %s34
      %s51 = sphi 0, %s35
      %s57 = sphi 0, %s59
      %s60 = sphi 0, %s57
      %s61 = sphi 0, %s60
      %s77 = sphi 0, %s61
      %s81 = sphi 0, %s81
      %s83 = sphi 0, %s81
      %s84 = sphi 0, %s83
      %s98 = sphi 0, %s84
      %s102 = sphi 0, %s102
      %s104 = sphi 0, %s102
      %s105 = sphi 0, %s104
      %s119 = sphi 0, %s105
      %s123 = sphi 0, %s123
      %s125 = sphi 0, %s123
      %s126 = sphi 0, %s125
      %s140 = sphi 0, %s126
      %s144 = sphi 0, %s144
      %s146 = sphi 0, %s144
      %s147 = sphi 0, %s146
      %s161 = sphi 0, %s147
      %s167 = sphi 0, %s169
      %s170 = sphi 0, %s167
      %s171 = sphi 0, %s170
      %s187 = sphi 0, %s171
      %s193 = sphi 0, %s195
      %s196 = sphi 0, %s193
      %s197 = sphi 0, %s196
      %s213 = sphi 0, %s197
      %s219 = sphi 0, %s221
      %s222 = sphi 0, %s219
      %s223 = sphi 0, %s222
      %s239 = sphi 0, %s223
    $region4: #{tpu_custom_call.1} parent=1 // loop_header_branch
      %24 = sbr.rel (%p22) target = $region8
    $region5: #{tpu_custom_call.1} parent=1 // loop_body
      %s26 = ssub.s32 %s21, 1
      %s27 = ssub.s32 %s21, 2
      %s28 = sadd.s32 %s21, 1
      %s29 = ssub.s32 %s21, %s28
      %p30 = scmp.eq.s32.totalorder %s29, 0
      %s32 = sadd.s32 %s31, 1
      %s33 = scalar_select %p30, %s31, %s32
      %p36 = pneg %p30
      %p37 = scmp.eq.s32.totalorder %s21, 1
      %p38 = por %p36, %p37
      %p39 = scmp.ne.s32.totalorder %s31, %s34
      %p40 = scmp.eq.s32.totalorder %s21, 0
      %p41 = por %p39, %p40
      %p42 = scmp.ne.s32.totalorder %s31, %s34
      %p43 = scmp.eq.s32.totalorder %s26, 1
      %p44 = por %p42, %p43
      %p45 = scmp.ne.s32.totalorder %s34, %s35
      %p46 = scmp.eq.s32.totalorder %s26, 0
      %p47 = por %p45, %p46
      %p48 = scmp.ne.s32.totalorder %s34, %s35
      %p49 = scmp.eq.s32.totalorder %s27, 1
      %p50 = por %p48, %p49
      %p52 = scmp.ne.s32.totalorder %s35, %s51
      %p53 = scmp.eq.s32.totalorder %s27, 0
      %p54 = por %p52, %p53
      %s55 = ssub.s32 %s21, %s28
      %p56 = scmp.eq.s32.totalorder %s55, 0
      %s58 = sadd.s32 %s57, 1
      %s59 = scalar_select %p56, %s57, %s58
      %p62 = pneg %p56
      %p63 = scmp.eq.s32.totalorder %s21, 1
      %p64 = por %p62, %p63
      %p65 = scmp.ne.s32.totalorder %s57, %s60
      %p66 = scmp.eq.s32.totalorder %s21, 0
      %p67 = por %p65, %p66
      %p68 = scmp.ne.s32.totalorder %s57, %s60
      %p69 = scmp.eq.s32.totalorder %s26, 1
      %p70 = por %p68, %p69
      %p71 = scmp.ne.s32.totalorder %s60, %s61
      %p72 = scmp.eq.s32.totalorder %s26, 0
      %p73 = por %p71, %p72
      %p74 = scmp.ne.s32.totalorder %s60, %s61
      %p75 = scmp.eq.s32.totalorder %s27, 1
      %p76 = por %p74, %p75
      %p78 = scmp.ne.s32.totalorder %s61, %s77
      %p79 = scmp.eq.s32.totalorder %s27, 0
      %p80 = por %p78, %p79
      %s82 = sadd.s32 %s81, 1
      %p85 = scmp.eq.s32.totalorder %s21, 1
      %p86 = scmp.ne.s32.totalorder %s81, %s83
      %p87 = scmp.eq.s32.totalorder %s21, 0
      %p88 = por %p86, %p87
      %p89 = scmp.ne.s32.totalorder %s81, %s83
      %p90 = scmp.eq.s32.totalorder %s26, 1
      %p91 = por %p89, %p90
      %p92 = scmp.ne.s32.totalorder %s83, %s84
      %p93 = scmp.eq.s32.totalorder %s26, 0
      %p94 = por %p92, %p93
      %p95 = scmp.ne.s32.totalorder %s83, %s84
      %p96 = scmp.eq.s32.totalorder %s27, 1
      %p97 = por %p95, %p96
      %p99 = scmp.ne.s32.totalorder %s84, %s98
      %p100 = scmp.eq.s32.totalorder %s27, 0
      %p101 = por %p99, %p100
      %s103 = sadd.s32 %s102, 1
      %p106 = scmp.eq.s32.totalorder %s21, 1
      %p107 = scmp.ne.s32.totalorder %s102, %s104
      %p108 = scmp.eq.s32.totalorder %s21, 0
      %p109 = por %p107, %p108
      %p110 = scmp.ne.s32.totalorder %s102, %s104
      %p111 = scmp.eq.s32.totalorder %s26, 1
      %p112 = por %p110, %p111
      %p113 = scmp.ne.s32.totalorder %s104, %s105
      %p114 = scmp.eq.s32.totalorder %s26, 0
      %p115 = por %p113, %p114
      %p116 = scmp.ne.s32.totalorder %s104, %s105
      %p117 = scmp.eq.s32.totalorder %s27, 1
      %p118 = por %p116, %p117
      %p120 = scmp.ne.s32.totalorder %s105, %s119
      %p121 = scmp.eq.s32.totalorder %s27, 0
      %p122 = por %p120, %p121
      %s124 = sadd.s32 %s123, 1
      %p127 = scmp.eq.s32.totalorder %s21, 1
      %p128 = scmp.ne.s32.totalorder %s123, %s125
      %p129 = scmp.eq.s32.totalorder %s21, 0
      %p130 = por %p128, %p129
      %p131 = scmp.ne.s32.totalorder %s123, %s125
      %p132 = scmp.eq.s32.totalorder %s26, 1
      %p133 = por %p131, %p132
      %p134 = scmp.ne.s32.totalorder %s125, %s126
      %p135 = scmp.eq.s32.totalorder %s26, 0
      %p136 = por %p134, %p135
      %p137 = scmp.ne.s32.totalorder %s125, %s126
      %p138 = scmp.eq.s32.totalorder %s27, 1
      %p139 = por %p137, %p138
      %p141 = scmp.ne.s32.totalorder %s126, %s140
      %p142 = scmp.eq.s32.totalorder %s27, 0
      %p143 = por %p141, %p142
      %s145 = sadd.s32 %s144, 1
      %p148 = scmp.eq.s32.totalorder %s21, 1
      %p149 = scmp.ne.s32.totalorder %s144, %s146
      %p150 = scmp.eq.s32.totalorder %s21, 0
      %p151 = por %p149, %p150
      %p152 = scmp.ne.s32.totalorder %s144, %s146
      %p153 = scmp.eq.s32.totalorder %s26, 1
      %p154 = por %p152, %p153
      %p155 = scmp.ne.s32.totalorder %s146, %s147
      %p156 = scmp.eq.s32.totalorder %s26, 0
      %p157 = por %p155, %p156
      %p158 = scmp.ne.s32.totalorder %s146, %s147
      %p159 = scmp.eq.s32.totalorder %s27, 1
      %p160 = por %p158, %p159
      %p162 = scmp.ne.s32.totalorder %s147, %s161
      %p163 = scmp.eq.s32.totalorder %s27, 0
      %p164 = por %p162, %p163
      %s165 = ssub.s32 %s21, %s28
      %p166 = scmp.eq.s32.totalorder %s165, 0
      %s168 = sadd.s32 %s167, 1
      %s169 = scalar_select %p166, %s167, %s168
      %p172 = pneg %p166
      %p173 = scmp.eq.s32.totalorder %s21, 1
      %p174 = por %p172, %p173
      %p175 = scmp.ne.s32.totalorder %s167, %s170
      %p176 = scmp.eq.s32.totalorder %s21, 0
      %p177 = por %p175, %p176
      %p178 = scmp.ne.s32.totalorder %s167, %s170
      %p179 = scmp.eq.s32.totalorder %s26, 1
      %p180 = por %p178, %p179
      %p181 = scmp.ne.s32.totalorder %s170, %s171
      %p182 = scmp.eq.s32.totalorder %s26, 0
      %p183 = por %p181, %p182
      %p184 = scmp.ne.s32.totalorder %s170, %s171
      %p185 = scmp.eq.s32.totalorder %s27, 1
      %p186 = por %p184, %p185
      %p188 = scmp.ne.s32.totalorder %s171, %s187
      %p189 = scmp.eq.s32.totalorder %s27, 0
      %p190 = por %p188, %p189
      %s191 = ssub.s32 %s21, %s28
      %p192 = scmp.eq.s32.totalorder %s191, 0
      %s194 = sadd.s32 %s193, 1
      %s195 = scalar_select %p192, %s193, %s194
      %p198 = pneg %p192
      %p199 = scmp.eq.s32.totalorder %s21, 1
      %p200 = por %p198, %p199
      %p201 = scmp.ne.s32.totalorder %s193, %s196
      %p202 = scmp.eq.s32.totalorder %s21, 0
      %p203 = por %p201, %p202
      %p204 = scmp.ne.s32.totalorder %s193, %s196
      %p205 = scmp.eq.s32.totalorder %s26, 1
      %p206 = por %p204, %p205
      %p207 = scmp.ne.s32.totalorder %s196, %s197
      %p208 = scmp.eq.s32.totalorder %s26, 0
      %p209 = por %p207, %p208
      %p210 = scmp.ne.s32.totalorder %s196, %s197
      %p211 = scmp.eq.s32.totalorder %s27, 1
      %p212 = por %p210, %p211
      %p214 = scmp.ne.s32.totalorder %s197, %s213
      %p215 = scmp.eq.s32.totalorder %s27, 0
      %p216 = por %p214, %p215
      %s217 = ssub.s32 %s21, %s28
      %p218 = scmp.eq.s32.totalorder %s217, 0
      %s220 = sadd.s32 %s219, 1
      %s221 = scalar_select %p218, %s219, %s220
      %p224 = pneg %p218
      %p225 = scmp.eq.s32.totalorder %s21, 1
      %p226 = por %p224, %p225
      %p227 = scmp.ne.s32.totalorder %s219, %s222
      %p228 = scmp.eq.s32.totalorder %s21, 0
      %p229 = por %p227, %p228
      %p230 = scmp.ne.s32.totalorder %s219, %s222
      %p231 = scmp.eq.s32.totalorder %s26, 1
      %p232 = por %p230, %p231
      %p233 = scmp.ne.s32.totalorder %s222, %s223
      %p234 = scmp.eq.s32.totalorder %s26, 0
      %p235 = por %p233, %p234
      %p236 = scmp.ne.s32.totalorder %s222, %s223
      %p237 = scmp.eq.s32.totalorder %s27, 1
      %p238 = por %p236, %p237
      %p240 = scmp.ne.s32.totalorder %s223, %s239
      %p241 = scmp.eq.s32.totalorder %s27, 0
      %p242 = por %p240, %p241
      %p243 = scmp.le.s32.totalorder 1, %s21
      %p244 = scmp.lt.s32.totalorder %s21, 3
      %p245 = pnand %p243, %p244
      %p246 = pneg %p245
      // Predicated region
      $region9: #{tpu_custom_call.1} parent=5 // pred_check
        _
      $region10: #{tpu_custom_call.1} parent=5 // pred_check_branch
        %248 = sbr.rel (%p245) target = $region12
      $region11: #{tpu_custom_call.1} parent=5 // pred_region
        %s249 = ssub.s32 %s21, 1
        // Predicated region
        $region13: #{tpu_custom_call.1} parent=11 // pred_check
          %p250 = pneg %p94
        $region14: #{tpu_custom_call.1} parent=11 // pred_check_branch
          %252 = sbr.rel (%p250) target = $region16
        $region15: #{tpu_custom_call.1} parent=11 // pred_region
          _
        $region16: #{tpu_custom_call.1} parent=11 // pred_fallthru
          _
        // Predicated region
        $region17: #{tpu_custom_call.1} parent=11 // pred_check
          %p253 = pneg %p115
        $region18: #{tpu_custom_call.1} parent=11 // pred_check_branch
          %255 = sbr.rel (%p253) target = $region20
        $region19: #{tpu_custom_call.1} parent=11 // pred_region
          _
        $region20: #{tpu_custom_call.1} parent=11 // pred_fallthru
          _
        // Predicated region
        $region21: #{tpu_custom_call.1} parent=11 // pred_check
          %p256 = pneg %p136
        $region22: #{tpu_custom_call.1} parent=11 // pred_check_branch
          %258 = sbr.rel (%p256) target = $region24
        $region23: #{tpu_custom_call.1} parent=11 // pred_region
          _
        $region24: #{tpu_custom_call.1} parent=11 // pred_fallthru
          _
        // Predicated region
        $region25: #{tpu_custom_call.1} parent=11 // pred_check
          %p259 = pneg %p157
        $region26: #{tpu_custom_call.1} parent=11 // pred_check_branch
          %261 = sbr.rel (%p259) target = $region28
        $region27: #{tpu_custom_call.1} parent=11 // pred_region
          _
        $region28: #{tpu_custom_call.1} parent=11 // pred_fallthru
          _
      $region12: #{tpu_custom_call.1} parent=5 // pred_fallthru
        _
      %p262 = scmp.lt.s32.totalorder %s21, 2
      // Predicated region
      $region29: #{tpu_custom_call.1} parent=5 // pred_check
        %p263 = pneg %p262
      $region30: #{tpu_custom_call.1} parent=5 // pred_check_branch
        %265 = sbr.rel (%p263) target = $region32
      $region31: #{tpu_custom_call.1} parent=5 // pred_region
        // Predicated region
        $region33: #{tpu_custom_call.1} parent=31 // pred_check
          %p266 = pneg %p41
        $region34: #{tpu_custom_call.1} parent=31 // pred_check_branch
          %268 = sbr.rel (%p266) target = $region36
        $region35: #{tpu_custom_call.1} parent=31 // pred_region
          %p269 = scmp.lt.s32.totalorder %s21, 1
          %s270 = scalar_select %p269, %s21, 1
          %s271 = smul.addr %s270, 4
          %s272 = smul.addr %s271, 8
          %s273 = scalar_lea.vmem %s0, %s272
        $region36: #{tpu_custom_call.1} parent=31 // pred_fallthru
          _
        // Predicated region
        $region37: #{tpu_custom_call.1} parent=31 // pred_check
          %p274 = pneg %p67
        $region38: #{tpu_custom_call.1} parent=31 // pred_check_branch
          %276 = sbr.rel (%p274) target = $region40
        $region39: #{tpu_custom_call.1} parent=31 // pred_region
          %p277 = scmp.lt.s32.totalorder %s21, 1
          %s278 = scalar_select %p277, %s21, 1
          %s279 = smul.addr %s278, 4
          %s280 = smul.addr %s279, 8
          %s281 = scalar_lea.vmem %s1, %s280
        $region40: #{tpu_custom_call.1} parent=31 // pred_fallthru
          _
      $region32: #{tpu_custom_call.1} parent=5 // pred_fallthru
        _
      %p282 = scmp.le.s32.totalorder 1, %s21
      %p283 = scmp.lt.s32.totalorder %s21, 3
      %p284 = pnand %p282, %p283
      %p285 = pneg %p284
      // Predicated region
      $region41: #{tpu_custom_call.1} parent=5 // pred_check
        _
      $region42: #{tpu_custom_call.1} parent=5 // pred_check_branch
        %287 = sbr.rel (%p284) target = $region44
      $region43: #{tpu_custom_call.1} parent=5 // pred_region
        %s288 = ssub.s32 %s21, 1
        %p289 = scmp.lt.s32.totalorder %s26, 1
        %s290 = scalar_select %p289, %s26, 1
        %s291 = smul.addr %s290, 4
        %s292 = smul.addr %s291, 8
        %s293 = scalar_lea.vmem %s0, %s292
        %p294 = pneg %p47
        %p295 = pneg %p44
        %p296 = scmp.lt.s32.totalorder %s26, 1
        %s297 = scalar_select %p296, %s26, 1
        %s298 = smul.addr %s297, 4
        %s299 = smul.addr %s298, 8
        %s300 = scalar_lea.vmem %s1, %s299
        %p301 = pneg %p73
        %p302 = pneg %p70
        %p303 = pneg %p94
        %p304 = pneg %p91
        %p305 = pneg %p115
        %p306 = pneg %p112
        %p307 = pneg %p136
        %p308 = pneg %p133
        %p309 = pneg %p157
        %p310 = pneg %p154
        %p311 = pneg %p183
        %p312 = pneg %p180
        %s313 = sand.u32 %s170, 1
        %s314 = scalar_lea.sflag [#allocation3], %s313
        %s315 = sand.u32 %s170, 1
        %s316 = smul.addr %s315, 8
        %s317 = scalar_lea.vmem [#allocation2], %s316
        %p318 = pneg %p209
        %p319 = pneg %p206
        %s320 = sand.u32 %s26, 1
        %s321 = scalar_lea.sflag [#allocation5], %s320
        %s322 = sand.u32 %s196, 1
        %s323 = smul.addr %s322, 8
        %s324 = scalar_lea.vmem [#allocation4], %s323
        %p325 = pneg %p235
        %p326 = pneg %p232
        %s327 = sand.u32 %s26, 1
        %s328 = scalar_lea.sflag [#allocation5], %s327
        %s329 = sand.u32 %s222, 1
        %s330 = smul.addr %s329, 8
        %s331 = scalar_lea.vmem [#allocation6], %s330
        %p332 = scmp.lt.s32.totalorder %s26, 1
        %s333 = scalar_select %p332, %s26, 1
        %s334 = smul.addr %s333, 4
        %s335 = smul.addr %s334, 8
        %s336 = scalar_lea.vmem %s0, %s335
        %p337 = scmp.lt.s32.totalorder %s26, 1
        %s338 = scalar_select %p337, %s26, 1
        %s339 = smul.addr %s338, 4
        %s340 = smul.addr %s339, 8
        %s341 = scalar_lea.vmem %s1, %s340
        %v342 = vld [vmem:[%s4] sm:$0xff]
        %v343 = vld [vmem:[%s4 + $0x8] sm:$0xff]
        %v344 = vld [vmem:[%s4 + $0x10] sm:$0xff]
        %v345 = vld [vmem:[%s4 + $0x18] sm:$0xff]
        %v346 = vld [vmem:[%s4 + $0x20] sm:$0xff]
        %v347 = vld [vmem:[%s4 + $0x28] sm:$0xff]
        %v348 = vld [vmem:[%s4 + $0x30] sm:$0xff]
        %v349 = vld [vmem:[%s4 + $0x38] sm:$0xff]
        %v350 = vld [vmem:[%s4 + $0x40] sm:$0xff]
        %v351 = vld [vmem:[%s4 + $0x48] sm:$0xff]
        %v352 = vld [vmem:[%s4 + $0x50] sm:$0xff]
        %v353 = vld [vmem:[%s4 + $0x58] sm:$0xff]
        %v354 = vld [vmem:[%s4 + $0x60] sm:$0xff]
        %v355 = vld [vmem:[%s4 + $0x68] sm:$0xff]
        %v356 = vld [vmem:[%s4 + $0x70] sm:$0xff]
        %v357 = vld [vmem:[%s4 + $0x78] sm:$0xff]
        %v358 = vld [vmem:[%s4 + $0x80] sm:$0xff]
        %v359 = vld [vmem:[%s4 + $0x88] sm:$0xff]
        %v360 = vld [vmem:[%s4 + $0x90] sm:$0xff]
        %v361 = vld [vmem:[%s4 + $0x98] sm:$0xff]
        %v362 = vld [vmem:[%s4 + $0xa0] sm:$0xff]
        %v363 = vld [vmem:[%s4 + $0xa8] sm:$0xff]
        %v364 = vld [vmem:[%s4 + $0xb0] sm:$0xff]
        %v365 = vld [vmem:[%s4 + $0xb8] sm:$0xff]
        %v366 = vld [vmem:[%s4 + $0xc0] sm:$0xff]
        %v367 = vld [vmem:[%s4 + $0xc8] sm:$0xff]
        %v368 = vld [vmem:[%s4 + $0xd0] sm:$0xff]
        %v369 = vld [vmem:[%s4 + $0xd8] sm:$0xff]
        %v370 = vld [vmem:[%s4 + $0xe0] sm:$0xff]
        %v371 = vld [vmem:[%s4 + $0xe8] sm:$0xff]
        %v372 = vld [vmem:[%s4 + $0xf0] sm:$0xff]
        %v373 = vld [vmem:[%s4 + $0xf8] sm:$0xff]
        %v374 = vld [vmem:[%s5] sm:$0xff]
        %v375 = vld [vmem:[%s5 + $0x8] sm:$0xff]
        %v376 = vld [vmem:[%s5 + $0x10] sm:$0xff]
        %v377 = vld [vmem:[%s5 + $0x18] sm:$0xff]
        %v378 = vld [vmem:[%s336] sm:$0xff]
        %v379 = vld [vmem:[%s336 + $0x8] sm:$0xff]
        %v380 = vld [vmem:[%s336 + $0x10] sm:$0xff]
        %v381 = vld [vmem:[%s336 + $0x18] sm:$0xff]
        %v382 = vld [vmem:[%s341] sm:$0xff]
        %v383 = vld [vmem:[%s341 + $0x8] sm:$0xff]
        %v384 = vld [vmem:[%s341 + $0x10] sm:$0xff]
        %v385 = vld [vmem:[%s341 + $0x18] sm:$0xff]
        %386 = vmatprep.subr.mxu0 0.0
        %387 = vmatpush1.msra.mxu0 %v357
        %388 = vmatprep.subr.mxu0 0.0
        %389 = vmatpush1.msra.mxu0 %v356
        %390 = vmatprep.subr.mxu0 0.0
        %391 = vmatpush1.msra.mxu0 %v355
        %392 = vmatprep.subr.mxu0 0.0
        %393 = vmatpush1.msra.mxu0 %v354
        %394 = vmatprep.subr.mxu0 0.0
        %395 = vmatpush1.msra.mxu0 %v353
        %396 = vmatprep.subr.mxu0 0.0
        %397 = vmatpush1.msra.mxu0 %v352
        %398 = vmatprep.subr.mxu0 0.0
        %399 = vmatpush1.msra.mxu0 %v351
        %400 = vmatprep.subr.mxu0 0.0
        %401 = vmatpush1.msra.mxu0 %v350
        %402 = vmatprep.subr.mxu0 0.0
        %403 = vmatpush1.msra.mxu0 %v349
        %404 = vmatprep.subr.mxu0 0.0
        %405 = vmatpush1.msra.mxu0 %v348
        %406 = vmatprep.subr.mxu0 0.0
        %407 = vmatpush1.msra.mxu0 %v347
        %408 = vmatprep.subr.mxu0 0.0
        %409 = vmatpush1.msra.mxu0 %v346
        %410 = vmatprep.subr.mxu0 0.0
        %411 = vmatpush1.msra.mxu0 %v345
        %412 = vmatprep.subr.mxu0 0.0
        %413 = vmatpush1.msra.mxu0 %v344
        %414 = vmatprep.subr.mxu0 0.0
        %415 = vmatpush1.msra.mxu0 %v343
        %416 = vmatprep.subr.mxu0 0.0
        %417 = vmatpush1.msra.mxu0 %v342
        %418 = vmatprep.subr.mxu0 0.0
        %419 = vmatpush2.msra.mxu0 %v373
        %420 = vmatprep.subr.mxu0 0.0
        %421 = vmatpush2.msra.mxu0 %v372
        %422 = vmatprep.subr.mxu0 0.0
        %423 = vmatpush2.msra.mxu0 %v371
        %424 = vmatprep.subr.mxu0 0.0
        %425 = vmatpush2.msra.mxu0 %v370
        %426 = vmatprep.subr.mxu0 0.0
        %427 = vmatpush2.msra.mxu0 %v369
        %428 = vmatprep.subr.mxu0 0.0
        %429 = vmatpush2.msra.mxu0 %v368
        %430 = vmatprep.subr.mxu0 0.0
        %431 = vmatpush2.msra.mxu0 %v367
        %432 = vmatprep.subr.mxu0 0.0
        %433 = vmatpush2.msra.mxu0 %v366
        %434 = vmatprep.subr.mxu0 0.0
        %435 = vmatpush2.msra.mxu0 %v365
        %436 = vmatprep.subr.mxu0 0.0
        %437 = vmatpush2.msra.mxu0 %v364
        %438 = vmatprep.subr.mxu0 0.0
        %439 = vmatpush2.msra.mxu0 %v363
        %440 = vmatprep.subr.mxu0 0.0
        %441 = vmatpush2.msra.mxu0 %v362
        %442 = vmatprep.subr.mxu0 0.0
        %443 = vmatpush2.msra.mxu0 %v361
        %444 = vmatprep.subr.mxu0 0.0
        %445 = vmatpush2.msra.mxu0 %v360
        %446 = vmatprep.subr.mxu0 0.0
        %447 = vmatpush2.msra.mxu0 %v359
        %448 = vmatprep.subr.mxu0 0.0
        %449 = vmatpush2.msra.mxu0 %v358
        %450 = vmatprep.mubr.f32.mxu0 %v379
        %451 = vmatmul.mubr.f32.gmra.mxu0 %v378
        %v452 = vpop.f32.mrf.mxu0
        %v453 = vadd.f32 0.0, %v452
        %v454 = vpop.f32.mrf.mxu0
        %455 = vmatprep.mubr.f32.mxu0 %v381
        %456 = vmatmul.mubr.f32.gmra.mxu0 %v380
        %v457 = vpop.f32.mrf.mxu0
        %v458 = vadd.f32 0.0, %v457
        %v459 = vpop.f32.mrf.mxu0
        %460 = vdwg.mxu0
        %v463 = vcombine.high %v453, %v453
        %v464 = vcombine.high %v458, %v458
        %467 = vmatprep.subr.mxu0 0.0
        %468 = vmatpush1.msra.mxu0 %v357
        %469 = vmatprep.subr.mxu0 0.0
        %470 = vmatpush1.msra.mxu0 %v356
        %471 = vmatprep.subr.mxu0 0.0
        %472 = vmatpush1.msra.mxu0 %v355
        %473 = vmatprep.subr.mxu0 0.0
        %474 = vmatpush1.msra.mxu0 %v354
        %475 = vmatprep.subr.mxu0 0.0
        %476 = vmatpush1.msra.mxu0 %v353
        %477 = vmatprep.subr.mxu0 0.0
        %478 = vmatpush1.msra.mxu0 %v352
        %479 = vmatprep.subr.mxu0 0.0
        %480 = vmatpush1.msra.mxu0 %v351
        %481 = vmatprep.subr.mxu0 0.0
        %482 = vmatpush1.msra.mxu0 %v350
        %483 = vmatprep.subr.mxu0 0.0
        %484 = vmatpush1.msra.mxu0 %v349
        %485 = vmatprep.subr.mxu0 0.0
        %486 = vmatpush1.msra.mxu0 %v348
        %487 = vmatprep.subr.mxu0 0.0
        %488 = vmatpush1.msra.mxu0 %v347
        %489 = vmatprep.subr.mxu0 0.0
        %490 = vmatpush1.msra.mxu0 %v346
        %491 = vmatprep.subr.mxu0 0.0
        %492 = vmatpush1.msra.mxu0 %v345
        %493 = vmatprep.subr.mxu0 0.0
        %494 = vmatpush1.msra.mxu0 %v344
        %495 = vmatprep.subr.mxu0 0.0
        %496 = vmatpush1.msra.mxu0 %v343
        %497 = vmatprep.subr.mxu0 0.0
        %498 = vmatpush1.msra.mxu0 %v342
        %499 = vmatprep.subr.mxu0 0.0
        %500 = vmatpush2.msra.mxu0 %v373
        %501 = vmatprep.subr.mxu0 0.0
        %502 = vmatpush2.msra.mxu0 %v372
        %503 = vmatprep.subr.mxu0 0.0
        %504 = vmatpush2.msra.mxu0 %v371
        %505 = vmatprep.subr.mxu0 0.0
        %506 = vmatpush2.msra.mxu0 %v370
        %507 = vmatprep.subr.mxu0 0.0
        %508 = vmatpush2.msra.mxu0 %v369
        %509 = vmatprep.subr.mxu0 0.0
        %510 = vmatpush2.msra.mxu0 %v368
        %511 = vmatprep.subr.mxu0 0.0
        %512 = vmatpush2.msra.mxu0 %v367
        %513 = vmatprep.subr.mxu0 0.0
        %514 = vmatpush2.msra.mxu0 %v366
        %515 = vmatprep.subr.mxu0 0.0
        %516 = vmatpush2.msra.mxu0 %v365
        %517 = vmatprep.subr.mxu0 0.0
        %518 = vmatpush2.msra.mxu0 %v364
        %519 = vmatprep.subr.mxu0 0.0
        %520 = vmatpush2.msra.mxu0 %v363
        %521 = vmatprep.subr.mxu0 0.0
        %522 = vmatpush2.msra.mxu0 %v362
        %523 = vmatprep.subr.mxu0 0.0
        %524 = vmatpush2.msra.mxu0 %v361
        %525 = vmatprep.subr.mxu0 0.0
        %526 = vmatpush2.msra.mxu0 %v360
        %527 = vmatprep.subr.mxu0 0.0
        %528 = vmatpush2.msra.mxu0 %v359
        %529 = vmatprep.subr.mxu0 0.0
        %530 = vmatpush2.msra.mxu0 %v358
        %531 = vmatprep.mubr.f32.mxu0 %v383
        %532 = vmatmul.mubr.f32.gmra.mxu0 %v382
        %v533 = vpop.f32.mrf.mxu0
        %v534 = vadd.f32 0.0, %v533
        %v535 = vpop.f32.mrf.mxu0
        %536 = vmatprep.mubr.f32.mxu0 %v385
        %537 = vmatmul.mubr.f32.gmra.mxu0 %v384
        %v538 = vpop.f32.mrf.mxu0
        %v539 = vadd.f32 0.0, %v538
        %v540 = vpop.f32.mrf.mxu0
        %541 = vdwg.mxu0
        %v544 = vcombine.high %v534, %v534
        %v545 = vcombine.high %v539, %v539
        %v552 = vcombine.low %v378, %v379
        %v553 = vcombine.high %v378, %v379
        %v554 = vcombine.low %v380, %v381
        %v555 = vcombine.high %v380, %v381
        %v564 = vcombine.low %v382, %v383
        %v565 = vcombine.high %v382, %v383
        %v566 = vcombine.low %v384, %v385
        %v567 = vcombine.high %v384, %v385
        %v572 = vld [vmem:[%s2] sm:$0xff]
        %v573 = vld [vmem:[%s3] sm:$0xf]
        %vm574 = vcmask 31744
        %v576 = vsel %vm574, %v572, 0
        %vm578 = vcmask 1043456
        %v579 = vsel %vm578, %v534, 0
        %581 = vmatprep.subr.mxu0 0.0
        %582 = vmatpush1.msra.mxu0 0.0
        %583 = vmatprep.subr.mxu0 0.0
        %584 = vmatpush1.msra.mxu0 0.0
        %585 = vmatprep.subr.mxu0 0.0
        %586 = vmatpush1.msra.mxu0 0.0
        %587 = vmatprep.subr.mxu0 0.0
        %588 = vmatpush1.msra.mxu0 0.0
        %589 = vmatprep.subr.mxu0 0.0
        %590 = vmatpush1.msra.mxu0 0.0
        %591 = vmatprep.subr.mxu0 0.0
        %592 = vmatpush1.msra.mxu0 0.0
        %593 = vmatprep.subr.mxu0 0.0
        %594 = vmatpush1.msra.mxu0 0.0
        %595 = vmatprep.subr.mxu0 0.0
        %596 = vmatpush1.msra.mxu0 0.0
        %597 = vmatprep.subr.mxu0 0.0
        %598 = vmatpush1.msra.mxu0 0.0
        %599 = vmatprep.subr.mxu0 0.0
        %600 = vmatpush1.msra.mxu0 0.0
        %601 = vmatprep.subr.mxu0 0.0
        %602 = vmatpush1.msra.mxu0 0.0
        %603 = vmatprep.subr.mxu0 0.0
        %604 = vmatpush1.msra.mxu0 0.0
        %605 = vmatprep.subr.mxu0 0.0
        %606 = vmatpush1.msra.mxu0 0.0
        %607 = vmatprep.subr.mxu0 0.0
        %608 = vmatpush1.msra.mxu0 0.0
        %609 = vmatprep.subr.mxu0 0.0
        %610 = vmatpush1.msra.mxu0 0.0
        %611 = vmatprep.subr.mxu0 0.0
        %612 = vmatpush1.msra.mxu0 %v579
        %613 = vmatprep.subr.mxu0 0.0
        %614 = vmatpush2.msra.mxu0 0.0
        %615 = vmatprep.subr.mxu0 0.0
        %616 = vmatpush2.msra.mxu0 0.0
        %617 = vmatprep.subr.mxu0 0.0
        %618 = vmatpush2.msra.mxu0 0.0
        %619 = vmatprep.subr.mxu0 0.0
        %620 = vmatpush2.msra.mxu0 0.0
        %621 = vmatprep.subr.mxu0 0.0
        %622 = vmatpush2.msra.mxu0 0.0
        %623 = vmatprep.subr.mxu0 0.0
        %624 = vmatpush2.msra.mxu0 0.0
        %625 = vmatprep.subr.mxu0 0.0
        %626 = vmatpush2.msra.mxu0 0.0
        %627 = vmatprep.subr.mxu0 0.0
        %628 = vmatpush2.msra.mxu0 0.0
        %629 = vmatprep.subr.mxu0 0.0
        %630 = vmatpush2.msra.mxu0 0.0
        %631 = vmatprep.subr.mxu0 0.0
        %632 = vmatpush2.msra.mxu0 0.0
        %633 = vmatprep.subr.mxu0 0.0
        %634 = vmatpush2.msra.mxu0 0.0
        %635 = vmatprep.subr.mxu0 0.0
        %636 = vmatpush2.msra.mxu0 0.0
        %637 = vmatprep.subr.mxu0 0.0
        %638 = vmatpush2.msra.mxu0 0.0
        %639 = vmatprep.subr.mxu0 0.0
        %640 = vmatpush2.msra.mxu0 0.0
        %641 = vmatprep.subr.mxu0 0.0
        %642 = vmatpush2.msra.mxu0 0.0
        %643 = vmatprep.subr.mxu0 0.0
        %644 = vmatpush2.msra.mxu0 0.0
        %645 = vmatprep.mubr.f32.mxu0 0.0
        %646 = vmatmul.mubr.f32.gmra.mxu0 %v576
        %v647 = vpop.f32.mrf.mxu0
        %v648 = vadd.f32 0.0, %v647
        %v649 = vpop.f32.mrf.mxu0
        %650 = vdwg.mxu0
        %v651 = vmul.f32 %v453, %v648
        %v652 = vmul.f32 %v463, %v648
        %v653 = vmul.f32 %v458, %v648
        %v654 = vmul.f32 %v464, %v648
        %vm655 = vcmask 125952
        %v656 = vsel %vm655, %v651, 0.0
        %v657 = vrot.slane %v656, 4
        %v658 = vadd.f32 %v656, %v657
        %v659 = vrot.slane %v658, 2
        %v660 = vadd.f32 %v658, %v659
        %v661 = vrot.slane %v660, 1
        %v662 = vadd.f32 %v660, %v661
        %v663 = vsel %vm655, %v652, 0.0
        %v664 = vrot.slane %v663, 4
        %v665 = vadd.f32 %v663, %v664
        %v666 = vrot.slane %v665, 2
        %v667 = vadd.f32 %v665, %v666
        %v668 = vrot.slane %v667, 1
        %v669 = vadd.f32 %v667, %v668
        %v670 = vsel %vm655, %v653, 0.0
        %v671 = vrot.slane %v670, 4
        %v672 = vadd.f32 %v670, %v671
        %v673 = vrot.slane %v672, 2
        %v674 = vadd.f32 %v672, %v673
        %v675 = vrot.slane %v674, 1
        %v676 = vadd.f32 %v674, %v675
        %v677 = vsel %vm655, %v654, 0.0
        %v678 = vrot.slane %v677, 4
        %v679 = vadd.f32 %v677, %v678
        %v680 = vrot.slane %v679, 2
        %v681 = vadd.f32 %v679, %v680
        %v682 = vrot.slane %v681, 1
        %v683 = vadd.f32 %v681, %v682
        %v685 = vrot.slane %v648, 4
        %v686 = vrot.slane %v648, 5
        %v687 = vrot.slane %v648, 6
        %v688 = vrot.slane %v648, 7
        %v693 = vadd.f32 %v662, %v685
        %v694 = vadd.f32 %v669, %v686
        %v695 = vadd.f32 %v676, %v687
        %v696 = vadd.f32 %v683, %v688
        %vm697 = vcmask 122880
        %v698 = vsel %vm697, %v693, -inf
        %v699 = vsel %vm697, %v694, -inf
        %v700 = vsel %vm697, %v695, -inf
        %v701 = vsel %vm697, %v696, -inf
        %v702 = vmax.f32 %v698, %v699
        %v703 = vmax.f32 %v700, %v701
        %v704 = vmax.f32 %v702, %v703
        %v705 = vlaneseq
        %v706 = vshrl.u32 %v705, 7
        %v707 = vsub.s32 0, %v706
        %v708 = vrot.slane %v704, %v707
        %v709 = vsub.f32 %v693, %v708
        %v710 = vsub.f32 %v694, %v708
        %v711 = vsub.f32 %v695, %v708
        %v712 = vsub.f32 %v696, %v708
        %v713 = vmul.f32 %v709, 1.442695
        %v714 = vpow.pop %v713
        %v715 = vmul.f32 %v710, 1.442695
        %v716 = vpow.pop %v715
        %v717 = vmul.f32 %v711, 1.442695
        %v718 = vpow.pop %v717
        %v719 = vmul.f32 %v712, 1.442695
        %v720 = vpow.pop %v719
        %v725 = vrot.slane %v716, 7
        %vm726 = vcmask 1041409
        %v727 = vsel %vm726, %v725, %v714
        %v728 = vrot.slane %v718, 6
        %vm729 = vcmask 1042434
        %v730 = vsel %vm729, %v728, %v727
        %v731 = vrot.slane %v720, 5
        %vm732 = vcmask 1043459
        %v733 = vsel %vm732, %v731, %v730
        %v735 = vsel %vm655, %v733, 0.0
        %v736 = vrot.slane %v735, 4
        %v737 = vadd.f32 %v735, %v736
        %v738 = vrot.slane %v737, 2
        %v739 = vadd.f32 %v737, %v738
        %v740 = vrot.slane %v739, 1
        %v741 = vadd.f32 %v739, %v740
        %v742 = vrcp.pop %v741
        %v743 = vlaneseq
        %v744 = vshrl.u32 %v743, 7
        %v745 = vsub.s32 0, %v744
        %v746 = vrot.slane %v742, %v745
        %v747 = vmul.f32 %v714, %v746
        %v748 = vmul.f32 %v716, %v746
        %v749 = vmul.f32 %v718, %v746
        %v750 = vmul.f32 %v720, %v746
        %v755 = vrot.slane %v748, 7
        %v756 = vsel %vm726, %v755, %v747
        %v757 = vrot.slane %v749, 6
        %v758 = vsel %vm729, %v757, %v756
        %v759 = vrot.slane %v750, 5
        %v760 = vsel %vm732, %v759, %v758
        %vm761 = vcmask 130048
        %v762 = vsel %vm761, %v760, 0
        %764 = vmatprep.subr.mxu0 0.0
        %765 = vmatpush1.msra.mxu0 0.0
        %766 = vmatprep.subr.mxu0 0.0
        %767 = vmatpush1.msra.mxu0 0.0
        %768 = vmatprep.subr.mxu0 0.0
        %769 = vmatpush1.msra.mxu0 0.0
        %770 = vmatprep.subr.mxu0 0.0
        %771 = vmatpush1.msra.mxu0 0.0
        %772 = vmatprep.subr.mxu0 0.0
        %773 = vmatpush1.msra.mxu0 0.0
        %774 = vmatprep.subr.mxu0 0.0
        %775 = vmatpush1.msra.mxu0 0.0
        %776 = vmatprep.subr.mxu0 0.0
        %777 = vmatpush1.msra.mxu0 0.0
        %778 = vmatprep.subr.mxu0 0.0
        %779 = vmatpush1.msra.mxu0 0.0
        %780 = vmatprep.subr.mxu0 0.0
        %781 = vmatpush1.msra.mxu0 0.0
        %782 = vmatprep.subr.mxu0 0.0
        %783 = vmatpush1.msra.mxu0 0.0
        %784 = vmatprep.subr.mxu0 0.0
        %785 = vmatpush1.msra.mxu0 0.0
        %786 = vmatprep.subr.mxu0 0.0
        %787 = vmatpush1.msra.mxu0 0.0
        %788 = vmatprep.subr.mxu0 0.0
        %789 = vmatpush1.msra.mxu0 0.0
        %790 = vmatprep.subr.mxu0 0.0
        %791 = vmatpush1.msra.mxu0 0.0
        %792 = vmatprep.subr.mxu0 %v377
        %793 = vmatpush1.msra.mxu0 %v376
        %794 = vmatprep.subr.mxu0 %v375
        %795 = vmatpush1.msra.mxu0 %v374
        %796 = vmatprep.subr.mxu0 0.0
        %797 = vmatpush2.msra.mxu0 0.0
        %798 = vmatprep.subr.mxu0 0.0
        %799 = vmatpush2.msra.mxu0 0.0
        %800 = vmatprep.subr.mxu0 0.0
        %801 = vmatpush2.msra.mxu0 0.0
        %802 = vmatprep.subr.mxu0 0.0
        %803 = vmatpush2.msra.mxu0 0.0
        %804 = vmatprep.subr.mxu0 0.0
        %805 = vmatpush2.msra.mxu0 0.0
        %806 = vmatprep.subr.mxu0 0.0
        %807 = vmatpush2.msra.mxu0 0.0
        %808 = vmatprep.subr.mxu0 0.0
        %809 = vmatpush2.msra.mxu0 0.0
        %810 = vmatprep.subr.mxu0 0.0
        %811 = vmatpush2.msra.mxu0 0.0
        %812 = vmatprep.subr.mxu0 0.0
        %813 = vmatpush2.msra.mxu0 0.0
        %814 = vmatprep.subr.mxu0 0.0
        %815 = vmatpush2.msra.mxu0 0.0
        %816 = vmatprep.subr.mxu0 0.0
        %817 = vmatpush2.msra.mxu0 0.0
        %818 = vmatprep.subr.mxu0 0.0
        %819 = vmatpush2.msra.mxu0 0.0
        %820 = vmatprep.subr.mxu0 0.0
        %821 = vmatpush2.msra.mxu0 0.0
        %822 = vmatprep.subr.mxu0 0.0
        %823 = vmatpush2.msra.mxu0 0.0
        %824 = vmatprep.subr.mxu0 0.0
        %825 = vmatpush2.msra.mxu0 0.0
        %826 = vmatprep.subr.mxu0 0.0
        %827 = vmatpush2.msra.mxu0 0.0
        %828 = vmatprep.mubr.f32.mxu0 0.0
        %829 = vmatmul.mubr.f32.gmra.mxu0 %v762
        %v830 = vpop.f32.mrf.mxu0
        %v831 = vadd.f32 0.0, %v830
        %v832 = vpop.f32.mrf.mxu0
        %v833 = vadd.f32 0.0, %v832
        %834 = vdwg.mxu0
        %v837 = vcombine.low %v831, %v833
        %v839 = vunpack.c.l.s4 1966171168
        %v840 = vunpack.c.0.s8 %v839
        %v841 = vlaneseq
        %v842 = vshrl.u32 %v841, 7
        %v843 = vsub.s32 %v840, %v842
        %v844 = vrot.slane %v837, %v843
        %v845 = vcombine.high %v844, %v844
        %v847 = vunpack.c.l.s4 1966171168
        %v848 = vunpack.c.0.s8 %v847
        %v849 = vlaneseq
        %v850 = vshrl.u32 %v849, 7
        %v851 = vsub.s32 %v848, %v850
        %v852 = vrot.slane %v844, %v851
        %v854 = vunpack.c.l.s4 1966171168
        %v855 = vunpack.c.0.s8 %v854
        %v856 = vlaneseq
        %v857 = vshrl.u32 %v856, 7
        %v858 = vsub.s32 %v855, %v857
        %v859 = vrot.slane %v845, %v858
        %v860 = vcombine.high %v852, %v852
        %v861 = vcombine.high %v859, %v859
        %v862 = vlaneseq
        %v863 = vshrl.u32 %v862, 7
        %v864 = vsub.s32 0, %v863
        %v865 = vrot.slane %v852, %v864
        %v866 = vlaneseq
        %v867 = vshrl.u32 %v866, 7
        %v868 = vsub.s32 1, %v867
        %v869 = vrot.slane %v852, %v868
        %v870 = vlaneseq
        %v871 = vshrl.u32 %v870, 7
        %v872 = vsub.s32 0, %v871
        %v873 = vrot.slane %v859, %v872
        %v874 = vlaneseq
        %v875 = vshrl.u32 %v874, 7
        %v876 = vsub.s32 1, %v875
        %v877 = vrot.slane %v859, %v876
        %v878 = vlaneseq
        %v879 = vshrl.u32 %v878, 7
        %v880 = vsub.s32 0, %v879
        %v881 = vrot.slane %v860, %v880
        %v882 = vlaneseq
        %v883 = vshrl.u32 %v882, 7
        %v884 = vsub.s32 1, %v883
        %v885 = vrot.slane %v860, %v884
        %v886 = vlaneseq
        %v887 = vshrl.u32 %v886, 7
        %v888 = vsub.s32 0, %v887
        %v889 = vrot.slane %v861, %v888
        %v890 = vlaneseq
        %v891 = vshrl.u32 %v890, 7
        %v892 = vsub.s32 1, %v891
        %v893 = vrot.slane %v861, %v892
        %v894 = vcombine.low %v865, %v869
        %v895 = vcombine.low %v873, %v877
        %v896 = vcombine.low %v881, %v885
        %v897 = vcombine.low %v889, %v893
        %v902 = vmul.f32 %v552, %v894
        %v903 = vmul.f32 %v553, %v895
        %v904 = vmul.f32 %v554, %v896
        %v905 = vmul.f32 %v555, %v897
        %v910 = vcombine.high %v902, %v902
        %v911 = vcombine.high %v903, %v903
        %v912 = vcombine.high %v904, %v904
        %v913 = vcombine.high %v905, %v905
        %v918 = vsel %vm578, %v902, 0.0
        %v919 = vsel %vm578, %v903, 0.0
        %v920 = vadd.f32 %v918, %v919
        %v921 = vsel %vm578, %v904, 0.0
        %v922 = vadd.f32 %v920, %v921
        %v923 = vsel %vm578, %v905, 0.0
        %v924 = vadd.f32 %v922, %v923
        %v925 = vsel %vm578, %v910, 0.0
        %v926 = vsel %vm578, %v911, 0.0
        %v927 = vadd.f32 %v925, %v926
        %v928 = vsel %vm578, %v912, 0.0
        %v929 = vadd.f32 %v927, %v928
        %v930 = vsel %vm578, %v913, 0.0
        %v931 = vadd.f32 %v929, %v930
        %v933 = vsel %vm574, %v573, 0
        %v936 = vsel %vm578, %v924, 0
        %v939 = vsel %vm578, %v931, 0
        %941 = vmatprep.subr.mxu0 0.0
        %942 = vmatpush1.msra.mxu0 0.0
        %943 = vmatprep.subr.mxu0 0.0
        %944 = vmatpush1.msra.mxu0 0.0
        %945 = vmatprep.subr.mxu0 0.0
        %946 = vmatpush1.msra.mxu0 0.0
        %947 = vmatprep.subr.mxu0 0.0
        %948 = vmatpush1.msra.mxu0 0.0
        %949 = vmatprep.subr.mxu0 0.0
        %950 = vmatpush1.msra.mxu0 0.0
        %951 = vmatprep.subr.mxu0 0.0
        %952 = vmatpush1.msra.mxu0 0.0
        %953 = vmatprep.subr.mxu0 0.0
        %954 = vmatpush1.msra.mxu0 0.0
        %955 = vmatprep.subr.mxu0 0.0
        %956 = vmatpush1.msra.mxu0 0.0
        %957 = vmatprep.subr.mxu0 0.0
        %958 = vmatpush1.msra.mxu0 0.0
        %959 = vmatprep.subr.mxu0 0.0
        %960 = vmatpush1.msra.mxu0 0.0
        %961 = vmatprep.subr.mxu0 0.0
        %962 = vmatpush1.msra.mxu0 0.0
        %963 = vmatprep.subr.mxu0 0.0
        %964 = vmatpush1.msra.mxu0 0.0
        %965 = vmatprep.subr.mxu0 0.0
        %966 = vmatpush1.msra.mxu0 0.0
        %967 = vmatprep.subr.mxu0 0.0
        %968 = vmatpush1.msra.mxu0 0.0
        %969 = vmatprep.subr.mxu0 0.0
        %970 = vmatpush1.msra.mxu0 0.0
        %971 = vmatprep.subr.mxu0 %v939
        %972 = vmatpush1.msra.mxu0 %v936
        %973 = vmatprep.subr.mxu0 0.0
        %974 = vmatpush2.msra.mxu0 0.0
        %975 = vmatprep.subr.mxu0 0.0
        %976 = vmatpush2.msra.mxu0 0.0
        %977 = vmatprep.subr.mxu0 0.0
        %978 = vmatpush2.msra.mxu0 0.0
        %979 = vmatprep.subr.mxu0 0.0
        %980 = vmatpush2.msra.mxu0 0.0
        %981 = vmatprep.subr.mxu0 0.0
        %982 = vmatpush2.msra.mxu0 0.0
        %983 = vmatprep.subr.mxu0 0.0
        %984 = vmatpush2.msra.mxu0 0.0
        %985 = vmatprep.subr.mxu0 0.0
        %986 = vmatpush2.msra.mxu0 0.0
        %987 = vmatprep.subr.mxu0 0.0
        %988 = vmatpush2.msra.mxu0 0.0
        %989 = vmatprep.subr.mxu0 0.0
        %990 = vmatpush2.msra.mxu0 0.0
        %991 = vmatprep.subr.mxu0 0.0
        %992 = vmatpush2.msra.mxu0 0.0
        %993 = vmatprep.subr.mxu0 0.0
        %994 = vmatpush2.msra.mxu0 0.0
        %995 = vmatprep.subr.mxu0 0.0
        %996 = vmatpush2.msra.mxu0 0.0
        %997 = vmatprep.subr.mxu0 0.0
        %998 = vmatpush2.msra.mxu0 0.0
        %999 = vmatprep.subr.mxu0 0.0
        %1000 = vmatpush2.msra.mxu0 0.0
        %1001 = vmatprep.subr.mxu0 0.0
        %1002 = vmatpush2.msra.mxu0 0.0
        %1003 = vmatprep.subr.mxu0 0.0
        %1004 = vmatpush2.msra.mxu0 0.0
        %1005 = vmatprep.mubr.f32.mxu0 0.0
        %1006 = vmatmul.mubr.f32.gmra.mxu0 %v933
        %v1007 = vpop.f32.mrf.mxu0
        %v1008 = vadd.f32 0.0, %v1007
        %v1009 = vpop.f32.mrf.mxu0
        %v1010 = vadd.f32 0.0, %v1009
        %1011 = vdwg.mxu0
        %v1014 = vcombine.low %v1008, %v1010
        %v1016 = vadd.f32 %v564, %v1014
        %s1017 = scalar_lea.vmem %s2, 8
        %v1018 = vld [vmem:[%s1017] sm:$0xff]
        %s1019 = scalar_lea.vmem %s3, 4
        %v1020 = vld [vmem:[%s1019] sm:$0xf]
        %v1022 = vsel %vm574, %v1018, 0
        %v1024 = vsel %vm578, %v453, 0
        %1026 = vmatprep.subr.mxu0 0.0
        %1027 = vmatpush1.msra.mxu0 0.0
        %1028 = vmatprep.subr.mxu0 0.0
        %1029 = vmatpush1.msra.mxu0 0.0
        %1030 = vmatprep.subr.mxu0 0.0
        %1031 = vmatpush1.msra.mxu0 0.0
        %1032 = vmatprep.subr.mxu0 0.0
        %1033 = vmatpush1.msra.mxu0 0.0
        %1034 = vmatprep.subr.mxu0 0.0
        %1035 = vmatpush1.msra.mxu0 0.0
        %1036 = vmatprep.subr.mxu0 0.0
        %1037 = vmatpush1.msra.mxu0 0.0
        %1038 = vmatprep.subr.mxu0 0.0
        %1039 = vmatpush1.msra.mxu0 0.0
        %1040 = vmatprep.subr.mxu0 0.0
        %1041 = vmatpush1.msra.mxu0 0.0
        %1042 = vmatprep.subr.mxu0 0.0
        %1043 = vmatpush1.msra.mxu0 0.0
        %1044 = vmatprep.subr.mxu0 0.0
        %1045 = vmatpush1.msra.mxu0 0.0
        %1046 = vmatprep.subr.mxu0 0.0
        %1047 = vmatpush1.msra.mxu0 0.0
        %1048 = vmatprep.subr.mxu0 0.0
        %1049 = vmatpush1.msra.mxu0 0.0
        %1050 = vmatprep.subr.mxu0 0.0
        %1051 = vmatpush1.msra.mxu0 0.0
        %1052 = vmatprep.subr.mxu0 0.0
        %1053 = vmatpush1.msra.mxu0 0.0
        %1054 = vmatprep.subr.mxu0 0.0
        %1055 = vmatpush1.msra.mxu0 0.0
        %1056 = vmatprep.subr.mxu0 0.0
        %1057 = vmatpush1.msra.mxu0 %v1024
        %1058 = vmatprep.subr.mxu0 0.0
        %1059 = vmatpush2.msra.mxu0 0.0
        %1060 = vmatprep.subr.mxu0 0.0
        %1061 = vmatpush2.msra.mxu0 0.0
        %1062 = vmatprep.subr.mxu0 0.0
        %1063 = vmatpush2.msra.mxu0 0.0
        %1064 = vmatprep.subr.mxu0 0.0
        %1065 = vmatpush2.msra.mxu0 0.0
        %1066 = vmatprep.subr.mxu0 0.0
        %1067 = vmatpush2.msra.mxu0 0.0
        %1068 = vmatprep.subr.mxu0 0.0
        %1069 = vmatpush2.msra.mxu0 0.0
        %1070 = vmatprep.subr.mxu0 0.0
        %1071 = vmatpush2.msra.mxu0 0.0
        %1072 = vmatprep.subr.mxu0 0.0
        %1073 = vmatpush2.msra.mxu0 0.0
        %1074 = vmatprep.subr.mxu0 0.0
        %1075 = vmatpush2.msra.mxu0 0.0
        %1076 = vmatprep.subr.mxu0 0.0
        %1077 = vmatpush2.msra.mxu0 0.0
        %1078 = vmatprep.subr.mxu0 0.0
        %1079 = vmatpush2.msra.mxu0 0.0
        %1080 = vmatprep.subr.mxu0 0.0
        %1081 = vmatpush2.msra.mxu0 0.0
        %1082 = vmatprep.subr.mxu0 0.0
        %1083 = vmatpush2.msra.mxu0 0.0
        %1084 = vmatprep.subr.mxu0 0.0
        %1085 = vmatpush2.msra.mxu0 0.0
        %1086 = vmatprep.subr.mxu0 0.0
        %1087 = vmatpush2.msra.mxu0 0.0
        %1088 = vmatprep.subr.mxu0 0.0
        %1089 = vmatpush2.msra.mxu0 0.0
        %1090 = vmatprep.mubr.f32.mxu0 0.0
        %1091 = vmatmul.mubr.f32.gmra.mxu0 %v1022
        %v1092 = vpop.f32.mrf.mxu0
        %v1093 = vadd.f32 0.0, %v1092
        %v1094 = vpop.f32.mrf.mxu0
        %1095 = vdwg.mxu0
        %v1096 = vmul.f32 %v534, %v1093
        %v1097 = vmul.f32 %v544, %v1093
        %v1098 = vmul.f32 %v539, %v1093
        %v1099 = vmul.f32 %v545, %v1093
        %v1100 = vsel %vm655, %v1096, 0.0
        %v1101 = vrot.slane %v1100, 4
        %v1102 = vadd.f32 %v1100, %v1101
        %v1103 = vrot.slane %v1102, 2
        %v1104 = vadd.f32 %v1102, %v1103
        %v1105 = vrot.slane %v1104, 1
        %v1106 = vadd.f32 %v1104, %v1105
        %v1107 = vsel %vm655, %v1097, 0.0
        %v1108 = vrot.slane %v1107, 4
        %v1109 = vadd.f32 %v1107, %v1108
        %v1110 = vrot.slane %v1109, 2
        %v1111 = vadd.f32 %v1109, %v1110
        %v1112 = vrot.slane %v1111, 1
        %v1113 = vadd.f32 %v1111, %v1112
        %v1114 = vsel %vm655, %v1098, 0.0
        %v1115 = vrot.slane %v1114, 4
        %v1116 = vadd.f32 %v1114, %v1115
        %v1117 = vrot.slane %v1116, 2
        %v1118 = vadd.f32 %v1116, %v1117
        %v1119 = vrot.slane %v1118, 1
        %v1120 = vadd.f32 %v1118, %v1119
        %v1121 = vsel %vm655, %v1099, 0.0
        %v1122 = vrot.slane %v1121, 4
        %v1123 = vadd.f32 %v1121, %v1122
        %v1124 = vrot.slane %v1123, 2
        %v1125 = vadd.f32 %v1123, %v1124
        %v1126 = vrot.slane %v1125, 1
        %v1127 = vadd.f32 %v1125, %v1126
        %v1129 = vrot.slane %v1093, 4
        %v1130 = vrot.slane %v1093, 5
        %v1131 = vrot.slane %v1093, 6
        %v1132 = vrot.slane %v1093, 7
        %v1137 = vadd.f32 %v1106, %v1129
        %v1138 = vadd.f32 %v1113, %v1130
        %v1139 = vadd.f32 %v1120, %v1131
        %v1140 = vadd.f32 %v1127, %v1132
        %v1141 = vsel %vm697, %v1137, -inf
        %v1142 = vsel %vm697, %v1138, -inf
        %v1143 = vsel %vm697, %v1139, -inf
        %v1144 = vsel %vm697, %v1140, -inf
        %v1145 = vmax.f32 %v1141, %v1142
        %v1146 = vmax.f32 %v1143, %v1144
        %v1147 = vmax.f32 %v1145, %v1146
        %v1148 = vlaneseq
        %v1149 = vshrl.u32 %v1148, 7
        %v1150 = vsub.s32 0, %v1149
        %v1151 = vrot.slane %v1147, %v1150
        %v1152 = vsub.f32 %v1137, %v1151
        %v1153 = vsub.f32 %v1138, %v1151
        %v1154 = vsub.f32 %v1139, %v1151
        %v1155 = vsub.f32 %v1140, %v1151
        %v1156 = vmul.f32 %v1152, 1.442695
        %v1157 = vpow.pop %v1156
        %v1158 = vmul.f32 %v1153, 1.442695
        %v1159 = vpow.pop %v1158
        %v1160 = vmul.f32 %v1154, 1.442695
        %v1161 = vpow.pop %v1160
        %v1162 = vmul.f32 %v1155, 1.442695
        %v1163 = vpow.pop %v1162
        %v1168 = vrot.slane %v1159, 7
        %v1169 = vsel %vm726, %v1168, %v1157
        %v1170 = vrot.slane %v1161, 6
        %v1171 = vsel %vm729, %v1170, %v1169
        %v1172 = vrot.slane %v1163, 5
        %v1173 = vsel %vm732, %v1172, %v1171
        %v1175 = vsel %vm655, %v1173, 0.0
        %v1176 = vrot.slane %v1175, 4
        %v1177 = vadd.f32 %v1175, %v1176
        %v1178 = vrot.slane %v1177, 2
        %v1179 = vadd.f32 %v1177, %v1178
        %v1180 = vrot.slane %v1179, 1
        %v1181 = vadd.f32 %v1179, %v1180
        %v1182 = vrcp.pop %v1181
        %v1183 = vlaneseq
        %v1184 = vshrl.u32 %v1183, 7
        %v1185 = vsub.s32 0, %v1184
        %v1186 = vrot.slane %v1182, %v1185
        %v1187 = vmul.f32 %v1157, %v1186
        %v1188 = vmul.f32 %v1159, %v1186
        %v1189 = vmul.f32 %v1161, %v1186
        %v1190 = vmul.f32 %v1163, %v1186
        %v1195 = vrot.slane %v1188, 7
        %v1196 = vsel %vm726, %v1195, %v1187
        %v1197 = vrot.slane %v1189, 6
        %v1198 = vsel %vm729, %v1197, %v1196
        %v1199 = vrot.slane %v1190, 5
        %v1200 = vsel %vm732, %v1199, %v1198
        %v1201 = vsel %vm761, %v1200, 0
        %1203 = vmatprep.subr.mxu0 0.0
        %1204 = vmatpush1.msra.mxu0 0.0
        %1205 = vmatprep.subr.mxu0 0.0
        %1206 = vmatpush1.msra.mxu0 0.0
        %1207 = vmatprep.subr.mxu0 0.0
        %1208 = vmatpush1.msra.mxu0 0.0
        %1209 = vmatprep.subr.mxu0 0.0
        %1210 = vmatpush1.msra.mxu0 0.0
        %1211 = vmatprep.subr.mxu0 0.0
        %1212 = vmatpush1.msra.mxu0 0.0
        %1213 = vmatprep.subr.mxu0 0.0
        %1214 = vmatpush1.msra.mxu0 0.0
        %1215 = vmatprep.subr.mxu0 0.0
        %1216 = vmatpush1.msra.mxu0 0.0
        %1217 = vmatprep.subr.mxu0 0.0
        %1218 = vmatpush1.msra.mxu0 0.0
        %1219 = vmatprep.subr.mxu0 0.0
        %1220 = vmatpush1.msra.mxu0 0.0
        %1221 = vmatprep.subr.mxu0 0.0
        %1222 = vmatpush1.msra.mxu0 0.0
        %1223 = vmatprep.subr.mxu0 0.0
        %1224 = vmatpush1.msra.mxu0 0.0
        %1225 = vmatprep.subr.mxu0 0.0
        %1226 = vmatpush1.msra.mxu0 0.0
        %1227 = vmatprep.subr.mxu0 0.0
        %1228 = vmatpush1.msra.mxu0 0.0
        %1229 = vmatprep.subr.mxu0 0.0
        %1230 = vmatpush1.msra.mxu0 0.0
        %1231 = vmatprep.subr.mxu0 %v377
        %1232 = vmatpush1.msra.mxu0 %v376
        %1233 = vmatprep.subr.mxu0 %v375
        %1234 = vmatpush1.msra.mxu0 %v374
        %1235 = vmatprep.subr.mxu0 0.0
        %1236 = vmatpush2.msra.mxu0 0.0
        %1237 = vmatprep.subr.mxu0 0.0
        %1238 = vmatpush2.msra.mxu0 0.0
        %1239 = vmatprep.subr.mxu0 0.0
        %1240 = vmatpush2.msra.mxu0 0.0
        %1241 = vmatprep.subr.mxu0 0.0
        %1242 = vmatpush2.msra.mxu0 0.0
        %1243 = vmatprep.subr.mxu0 0.0
        %1244 = vmatpush2.msra.mxu0 0.0
        %1245 = vmatprep.subr.mxu0 0.0
        %1246 = vmatpush2.msra.mxu0 0.0
        %1247 = vmatprep.subr.mxu0 0.0
        %1248 = vmatpush2.msra.mxu0 0.0
        %1249 = vmatprep.subr.mxu0 0.0
        %1250 = vmatpush2.msra.mxu0 0.0
        %1251 = vmatprep.subr.mxu0 0.0
        %1252 = vmatpush2.msra.mxu0 0.0
        %1253 = vmatprep.subr.mxu0 0.0
        %1254 = vmatpush2.msra.mxu0 0.0
        %1255 = vmatprep.subr.mxu0 0.0
        %1256 = vmatpush2.msra.mxu0 0.0
        %1257 = vmatprep.subr.mxu0 0.0
        %1258 = vmatpush2.msra.mxu0 0.0
        %1259 = vmatprep.subr.mxu0 0.0
        %1260 = vmatpush2.msra.mxu0 0.0
        %1261 = vmatprep.subr.mxu0 0.0
        %1262 = vmatpush2.msra.mxu0 0.0
        %1263 = vmatprep.subr.mxu0 0.0
        %1264 = vmatpush2.msra.mxu0 0.0
        %1265 = vmatprep.subr.mxu0 0.0
        %1266 = vmatpush2.msra.mxu0 0.0
        %1267 = vmatprep.mubr.f32.mxu0 0.0
        %1268 = vmatmul.mubr.f32.gmra.mxu0 %v1201
        %v1269 = vpop.f32.mrf.mxu0
        %v1270 = vadd.f32 0.0, %v1269
        %v1271 = vpop.f32.mrf.mxu0
        %v1272 = vadd.f32 0.0, %v1271
        %1273 = vdwg.mxu0
        %v1276 = vcombine.low %v1270, %v1272
        %v1278 = vunpack.c.l.s4 1966171168
        %v1279 = vunpack.c.0.s8 %v1278
        %v1280 = vlaneseq
        %v1281 = vshrl.u32 %v1280, 7
        %v1282 = vsub.s32 %v1279, %v1281
        %v1283 = vrot.slane %v1276, %v1282
        %v1284 = vcombine.high %v1283, %v1283
        %v1286 = vunpack.c.l.s4 1966171168
        %v1287 = vunpack.c.0.s8 %v1286
        %v1288 = vlaneseq
        %v1289 = vshrl.u32 %v1288, 7
        %v1290 = vsub.s32 %v1287, %v1289
        %v1291 = vrot.slane %v1283, %v1290
        %v1293 = vunpack.c.l.s4 1966171168
        %v1294 = vunpack.c.0.s8 %v1293
        %v1295 = vlaneseq
        %v1296 = vshrl.u32 %v1295, 7
        %v1297 = vsub.s32 %v1294, %v1296
        %v1298 = vrot.slane %v1284, %v1297
        %v1299 = vcombine.high %v1291, %v1291
        %v1300 = vcombine.high %v1298, %v1298
        %v1301 = vlaneseq
        %v1302 = vshrl.u32 %v1301, 7
        %v1303 = vsub.s32 0, %v1302
        %v1304 = vrot.slane %v1291, %v1303
        %v1305 = vlaneseq
        %v1306 = vshrl.u32 %v1305, 7
        %v1307 = vsub.s32 1, %v1306
        %v1308 = vrot.slane %v1291, %v1307
        %v1309 = vlaneseq
        %v1310 = vshrl.u32 %v1309, 7
        %v1311 = vsub.s32 0, %v1310
        %v1312 = vrot.slane %v1298, %v1311
        %v1313 = vlaneseq
        %v1314 = vshrl.u32 %v1313, 7
        %v1315 = vsub.s32 1, %v1314
        %v1316 = vrot.slane %v1298, %v1315
        %v1317 = vlaneseq
        %v1318 = vshrl.u32 %v1317, 7
        %v1319 = vsub.s32 0, %v1318
        %v1320 = vrot.slane %v1299, %v1319
        %v1321 = vlaneseq
        %v1322 = vshrl.u32 %v1321, 7
        %v1323 = vsub.s32 1, %v1322
        %v1324 = vrot.slane %v1299, %v1323
        %v1325 = vlaneseq
        %v1326 = vshrl.u32 %v1325, 7
        %v1327 = vsub.s32 0, %v1326
        %v1328 = vrot.slane %v1300, %v1327
        %v1329 = vlaneseq
        %v1330 = vshrl.u32 %v1329, 7
        %v1331 = vsub.s32 1, %v1330
        %v1332 = vrot.slane %v1300, %v1331
        %v1333 = vcombine.low %v1304, %v1308
        %v1334 = vcombine.low %v1312, %v1316
        %v1335 = vcombine.low %v1320, %v1324
        %v1336 = vcombine.low %v1328, %v1332
        %v1341 = vmul.f32 %v564, %v1333
        %v1342 = vmul.f32 %v565, %v1334
        %v1343 = vmul.f32 %v566, %v1335
        %v1344 = vmul.f32 %v567, %v1336
        %v1349 = vcombine.high %v1341, %v1341
        %v1350 = vcombine.high %v1342, %v1342
        %v1351 = vcombine.high %v1343, %v1343
        %v1352 = vcombine.high %v1344, %v1344
        %v1357 = vsel %vm578, %v1341, 0.0
        %v1358 = vsel %vm578, %v1342, 0.0
        %v1359 = vadd.f32 %v1357, %v1358
        %v1360 = vsel %vm578, %v1343, 0.0
        %v1361 = vadd.f32 %v1359, %v1360
        %v1362 = vsel %vm578, %v1344, 0.0
        %v1363 = vadd.f32 %v1361, %v1362
        %v1364 = vsel %vm578, %v1349, 0.0
        %v1365 = vsel %vm578, %v1350, 0.0
        %v1366 = vadd.f32 %v1364, %v1365
        %v1367 = vsel %vm578, %v1351, 0.0
        %v1368 = vadd.f32 %v1366, %v1367
        %v1369 = vsel %vm578, %v1352, 0.0
        %v1370 = vadd.f32 %v1368, %v1369
        %v1372 = vsel %vm574, %v1020, 0
        %v1375 = vsel %vm578, %v1363, 0
        %v1378 = vsel %vm578, %v1370, 0
        %1380 = vmatprep.subr.mxu0 0.0
        %1381 = vmatpush1.msra.mxu0 0.0
        %1382 = vmatprep.subr.mxu0 0.0
        %1383 = vmatpush1.msra.mxu0 0.0
        %1384 = vmatprep.subr.mxu0 0.0
        %1385 = vmatpush1.msra.mxu0 0.0
        %1386 = vmatprep.subr.mxu0 0.0
        %1387 = vmatpush1.msra.mxu0 0.0
        %1388 = vmatprep.subr.mxu0 0.0
        %1389 = vmatpush1.msra.mxu0 0.0
        %1390 = vmatprep.subr.mxu0 0.0
        %1391 = vmatpush1.msra.mxu0 0.0
        %1392 = vmatprep.subr.mxu0 0.0
        %1393 = vmatpush1.msra.mxu0 0.0
        %1394 = vmatprep.subr.mxu0 0.0
        %1395 = vmatpush1.msra.mxu0 0.0
        %1396 = vmatprep.subr.mxu0 0.0
        %1397 = vmatpush1.msra.mxu0 0.0
        %1398 = vmatprep.subr.mxu0 0.0
        %1399 = vmatpush1.msra.mxu0 0.0
        %1400 = vmatprep.subr.mxu0 0.0
        %1401 = vmatpush1.msra.mxu0 0.0
        %1402 = vmatprep.subr.mxu0 0.0
        %1403 = vmatpush1.msra.mxu0 0.0
        %1404 = vmatprep.subr.mxu0 0.0
        %1405 = vmatpush1.msra.mxu0 0.0
        %1406 = vmatprep.subr.mxu0 0.0
        %1407 = vmatpush1.msra.mxu0 0.0
        %1408 = vmatprep.subr.mxu0 0.0
        %1409 = vmatpush1.msra.mxu0 0.0
        %1410 = vmatprep.subr.mxu0 %v1378
        %1411 = vmatpush1.msra.mxu0 %v1375
        %1412 = vmatprep.subr.mxu0 0.0
        %1413 = vmatpush2.msra.mxu0 0.0
        %1414 = vmatprep.subr.mxu0 0.0
        %1415 = vmatpush2.msra.mxu0 0.0
        %1416 = vmatprep.subr.mxu0 0.0
        %1417 = vmatpush2.msra.mxu0 0.0
        %1418 = vmatprep.subr.mxu0 0.0
        %1419 = vmatpush2.msra.mxu0 0.0
        %1420 = vmatprep.subr.mxu0 0.0
        %1421 = vmatpush2.msra.mxu0 0.0
        %1422 = vmatprep.subr.mxu0 0.0
        %1423 = vmatpush2.msra.mxu0 0.0
        %1424 = vmatprep.subr.mxu0 0.0
        %1425 = vmatpush2.msra.mxu0 0.0
        %1426 = vmatprep.subr.mxu0 0.0
        %1427 = vmatpush2.msra.mxu0 0.0
        %1428 = vmatprep.subr.mxu0 0.0
        %1429 = vmatpush2.msra.mxu0 0.0
        %1430 = vmatprep.subr.mxu0 0.0
        %1431 = vmatpush2.msra.mxu0 0.0
        %1432 = vmatprep.subr.mxu0 0.0
        %1433 = vmatpush2.msra.mxu0 0.0
        %1434 = vmatprep.subr.mxu0 0.0
        %1435 = vmatpush2.msra.mxu0 0.0
        %1436 = vmatprep.subr.mxu0 0.0
        %1437 = vmatpush2.msra.mxu0 0.0
        %1438 = vmatprep.subr.mxu0 0.0
        %1439 = vmatpush2.msra.mxu0 0.0
        %1440 = vmatprep.subr.mxu0 0.0
        %1441 = vmatpush2.msra.mxu0 0.0
        %1442 = vmatprep.subr.mxu0 0.0
        %1443 = vmatpush2.msra.mxu0 0.0
        %1444 = vmatprep.mubr.f32.mxu0 0.0
        %1445 = vmatmul.mubr.f32.gmra.mxu0 %v1372
        %v1446 = vpop.f32.mrf.mxu0
        %v1447 = vadd.f32 0.0, %v1446
        %v1448 = vpop.f32.mrf.mxu0
        %v1449 = vadd.f32 0.0, %v1448
        %1450 = vdwg.mxu0
        %v1453 = vcombine.low %v1447, %v1449
        %v1455 = vadd.f32 %v552, %v1453
        %1456 = vst [vmem:[%s324] sm:$0xff] %v1016
        %1457 = vst [vmem:[%s331] sm:$0xff] %v1455
        %v1458 = vadd.f32 %v1016, %v1455
        %1459 = vst [vmem:[%s317] sm:$0xff] %v1458
        %s1460 = sand.u32 %s170, 1
        %s1461 = scalar_lea.sflag [#allocation3], %s1460
        %s1462 = sand.u32 %s170, 1
        %s1463 = smul.addr %s1462, 8
        %s1464 = scalar_lea.vmem [#allocation2], %s1463
        %s1465 = sand.u32 %s26, 1
        %s1466 = scalar_lea.sflag [#allocation5], %s1465
        %s1467 = sand.u32 %s196, 1
        %s1468 = smul.addr %s1467, 8
        %s1469 = scalar_lea.vmem [#allocation4], %s1468
        %s1470 = sand.u32 %s26, 1
        %s1471 = scalar_lea.sflag [#allocation5], %s1470
        %s1472 = sand.u32 %s222, 1
        %s1473 = smul.addr %s1472, 8
        %s1474 = scalar_lea.vmem [#allocation6], %s1473
        // Predicated region
        $region45: #{tpu_custom_call.1} parent=43 // pred_check
          %p1475 = pneg %p180
        $region46: #{tpu_custom_call.1} parent=43 // pred_check_branch
          %1477 = sbr.rel (%p1475) target = $region48
        $region47: #{tpu_custom_call.1} parent=43 // pred_region
          %s1479 = ssub.s32 128, 128
          %1480 = vsyncadd %s1461, %s1479
          %s1481 = smul.addr %s26, 2
          %s1482 = smul.addr %s1481, 64
          %s1483 = scalar_lea.hbm %s6, %s1482
          %s1485 = sshll.u32 %s1464, 4
          %s1486 = int_to_ptr.vmem [resolvable:$true] %s1485
          %1488 = dma.vmem_to_hbm [thread:$0]  %s1486, 128, %s1483, %s1461
        $region48: #{tpu_custom_call.1} parent=43 // pred_fallthru
          _
        // Predicated region
        $region49: #{tpu_custom_call.1} parent=43 // pred_check
          %p1489 = pneg %p206
        $region50: #{tpu_custom_call.1} parent=43 // pred_check_branch
          %1491 = sbr.rel (%p1489) target = $region52
        $region51: #{tpu_custom_call.1} parent=43 // pred_region
          %s1493 = ssub.s32 128, 128
          %1494 = vsyncadd %s1466, %s1493
          %s1495 = smul.addr %s26, 2
          %s1496 = smul.addr %s1495, 64
          %s1497 = scalar_lea.hbm %s7, %s1496
          %s1499 = sshll.u32 %s1469, 4
          %s1500 = int_to_ptr.vmem [resolvable:$true] %s1499
          %1502 = dma.vmem_to_hbm [thread:$0]  %s1500, 128, %s1497, %s1466
        $region52: #{tpu_custom_call.1} parent=43 // pred_fallthru
          _
        // Predicated region
        $region53: #{tpu_custom_call.1} parent=43 // pred_check
          %p1503 = pneg %p232
        $region54: #{tpu_custom_call.1} parent=43 // pred_check_branch
          %1505 = sbr.rel (%p1503) target = $region56
        $region55: #{tpu_custom_call.1} parent=43 // pred_region
          %s1507 = ssub.s32 128, 128
          %1508 = vsyncadd %s1471, %s1507
          %s1509 = smul.addr %s26, 2
          %s1510 = smul.addr %s1509, 64
          %s1511 = scalar_lea.hbm %s8, %s1510
          %s1513 = sshll.u32 %s1474, 4
          %s1514 = int_to_ptr.vmem [resolvable:$true] %s1513
          %1516 = dma.vmem_to_hbm [thread:$0]  %s1514, 128, %s1511, %s1471
        $region56: #{tpu_custom_call.1} parent=43 // pred_fallthru
          _
      $region44: #{tpu_custom_call.1} parent=5 // pred_fallthru
        _
      %p1517 = scmp.le.s32.totalorder 2, %s21
      // Predicated region
      $region57: #{tpu_custom_call.1} parent=5 // pred_check
        %p1518 = pneg %p1517
      $region58: #{tpu_custom_call.1} parent=5 // pred_check_branch
        %1520 = sbr.rel (%p1518) target = $region60
      $region59: #{tpu_custom_call.1} parent=5 // pred_region
        %s1521 = ssub.s32 %s21, 2
        // Predicated region
        $region61: #{tpu_custom_call.1} parent=59 // pred_check
          %p1522 = pneg %p186
        $region62: #{tpu_custom_call.1} parent=59 // pred_check_branch
          %1524 = sbr.rel (%p1522) target = $region64
        $region63: #{tpu_custom_call.1} parent=59 // pred_region
          %s1525 = sand.u32 %s171, 1
          %s1526 = scalar_lea.sflag [#allocation3], %s1525
          %s1527 = sand.u32 %s171, 1
          %s1528 = smul.addr %s1527, 8
          %s1529 = scalar_lea.vmem [#allocation2], %s1528
          %1530 = dma.done %s1526, 128
        $region64: #{tpu_custom_call.1} parent=59 // pred_fallthru
          _
        // Predicated region
        $region65: #{tpu_custom_call.1} parent=59 // pred_check
          %p1531 = pneg %p212
        $region66: #{tpu_custom_call.1} parent=59 // pred_check_branch
          %1533 = sbr.rel (%p1531) target = $region68
        $region67: #{tpu_custom_call.1} parent=59 // pred_region
          %s1534 = sand.u32 %s27, 1
          %s1535 = scalar_lea.sflag [#allocation5], %s1534
          %s1536 = sand.u32 %s197, 1
          %s1537 = smul.addr %s1536, 8
          %s1538 = scalar_lea.vmem [#allocation4], %s1537
          %1539 = dma.done %s1535, 128
        $region68: #{tpu_custom_call.1} parent=59 // pred_fallthru
          _
        // Predicated region
        $region69: #{tpu_custom_call.1} parent=59 // pred_check
          %p1540 = pneg %p238
        $region70: #{tpu_custom_call.1} parent=59 // pred_check_branch
          %1542 = sbr.rel (%p1540) target = $region72
        $region71: #{tpu_custom_call.1} parent=59 // pred_region
          %s1543 = sand.u32 %s27, 1
          %s1544 = scalar_lea.sflag [#allocation5], %s1543
          %s1545 = sand.u32 %s223, 1
          %s1546 = smul.addr %s1545, 8
          %s1547 = scalar_lea.vmem [#allocation6], %s1546
          %1548 = dma.done %s1544, 128
        $region72: #{tpu_custom_call.1} parent=59 // pred_fallthru
          _
      $region60: #{tpu_custom_call.1} parent=5 // pred_fallthru
        _
    $region6: #{tpu_custom_call.1} parent=1 // loop_footer
      %s25 = sadd.s32 1, %s21
    $region7: #{tpu_custom_call.1} parent=1 // loop_footer_branch
      %20 = sbr.rel target = $region3
    $region8: #{tpu_custom_call.1} parent=1 // loop_exit
      _
    %1549 = vsyncpa [#allocation3], 1
    %s1550 = scalar_lea.sflag [#allocation3], 1
    %1551 = vsyncpa %s1550, 1
    %1552 = vsyncpa [#allocation5], 1
    %s1553 = scalar_lea.sflag [#allocation5], 1
    %1554 = vsyncpa %s1553, 1

</llo_original>
